<compile_context>
chip_gen: v7x
topology: tpu7x:2x2x1
jax: 0.10.0
libtpu: 0.0.40
codegen_flags: <defaults>
</compile_context>

<pallas_src>
import functools

import jax
import jax.numpy as jnp
from jax.experimental import pallas as pl
from jax.experimental.pallas import tpu as pltpu


def _round_up(x, m):
    return ((x + m - 1) // m) * m


def _pad_gate_dim(w, H, H_pad):
    """Pad the leading (4H) gate axis to 4*H_pad, padding each of the four
    PyTorch gate blocks [i, f, g, o] independently with zeros."""
    w4 = w.reshape(4, H, *w.shape[1:])
    pads = [(0, 0), (0, H_pad - H)] + [(0, 0)] * (w.ndim - 1)
    return jnp.pad(w4, pads).reshape(4 * H_pad, *w.shape[1:])


def _sigmoid_via_tanh(x):
    # sigmoid(x) == 0.5 * tanh(0.5 * x) + 0.5  (exact): 1 EUP op instead of exp+recip.
    return 0.5 * jnp.tanh(0.5 * x) + 0.5


def _pick_t_chunk(S, b_blk, H_pad, return_sequence, budget_bytes):
    """Largest time chunk whose pipelined VMEM working set fits the budget."""
    G = 4 * H_pad
    fixed = H_pad * G * 2 + 2 * b_blk * H_pad * 4          # resident W_hh copy + h/c state
    per_t = 2 * b_blk * G * 2                              # gx chunk, double-buffered, bf16
    if return_sequence:
        per_t += 2 * b_blk * H_pad * 2                     # seq-out chunk, double-buffered, bf16
    avail = max(budget_bytes - fixed, per_t)
    t = max(1, avail // per_t)
    t = min(int(t), 512, S)                                # grid-step overhead already amortized
    if t >= 8:
        t = (t // 8) * 8                                   # keep the fori unrollable by 8
    return t


def _lstm_recurrence_kernel(gx_ref, whh_hbm_ref, *rest, seq_len, t_chunk,
                            hidden_pad, return_sequence):
    """Recurrent part of one LSTM layer.

    grid = (batch_block [parallel], time_chunk [arbitrary/sequential]).
    gx_ref      : (t_chunk, B_blk, 4H) bf16 = x@W_ih^T + bias, precomputed.
    whh_hbm_ref : (H, 4H) bf16 W_hh^T left in HBM (memory_space=pl.ANY).
    outputs     : (out_ref, hn_ref) if return_sequence else (hn_ref,).
    scratch     : whh_vmem (single-buffered W_hh^T), h_sc, c_sc (f32 state).
    """
    if return_sequence:
        out_ref, hn_ref, whh_vmem, h_sc, c_sc = rest
    else:
        hn_ref, whh_vmem, h_sc, c_sc = rest

    chunk = pl.program_id(1)
    n_chunks = pl.num_programs(1)
    H = hidden_pad

    @pl.when(chunk == 0)
    def _():
        # Constant recurrent weight: copy once into a single-buffered VMEM
        # scratch (avoids the default 2-deep pipeline buffer for it).
        pltpu.sync_copy(whh_hbm_ref, whh_vmem)
        h_sc[...] = jnp.zeros_like(h_sc)
        c_sc[...] = jnp.zeros_like(c_sc)

    has_tail = (seq_len % t_chunk) != 0      # static (trace-time) flag

    def step(tt, carry):
        h_prev, c_prev = carry
        # gates = (x_t @ W_ih^T + b) [precomputed, bf16] + h_prev @ W_hh^T (bf16 MXU, f32 acc)
        gates = gx_ref[tt].astype(jnp.float32) + jnp.dot(
            h_prev.astype(jnp.bfloat16), whh_vmem[...],
            preferred_element_type=jnp.float32)
        # PyTorch gate order [i, f, g, o]; H is a multiple of 128 -> whole-vreg slices.
        i_g = _sigmoid_via_tanh(gates[:, 0 * H:1 * H])
        f_g = _sigmoid_via_tanh(gates[:, 1 * H:2 * H])
        g_g = jnp.tanh(gates[:, 2 * H:3 * H])
        o_g = _sigmoid_via_tanh(gates[:, 3 * H:4 * H])

        c_new = f_g * c_prev + i_g * g_g
        h_new = o_g * jnp.tanh(c_new)

        if has_tail:  # mask padded tail steps (carry previous state through)
            valid = (chunk * t_chunk + tt) < seq_len
            h_new = jnp.where(valid, h_new, h_prev)
            c_new = jnp.where(valid, c_new, c_prev)

        if return_sequence:
            out_ref[tt] = h_new.astype(out_ref.dtype)
        return (h_new, c_new)

    unroll = 8 if (t_chunk % 8 == 0) else 1
    h_fin, c_fin = jax.lax.fori_loop(0, t_chunk, step, (h_sc[...], c_sc[...]),
                                     unroll=unroll)
    h_sc[...] = h_fin
    c_sc[...] = c_fin

    # single f32 write of the final hidden state, only on the last chunk
    @pl.when(chunk == n_chunks - 1)
    def _():
        hn_ref[...] = h_fin.astype(hn_ref.dtype)


def lstm_layer(x, w_ih, w_hh, b_ih, b_hh, *, return_sequence,
               vmem_budget_bytes=40 * 1024 * 1024):
    """One LSTM layer on a batch-padded input.

    x: (S, B_pad, D_in) f32/bf16 with B_pad a multiple of 16.
    Returns (sequence (S, B_pad, H_pad) bf16 or None, h_n (B_pad, H_pad) f32).
    """
    S, B_pad, D_in = x.shape
    fourH, H = w_hh.shape
    assert fourH == 4 * H
    H_pad = _round_up(H, 128)
    G = 4 * H_pad

    # ---- per-gate zero-padding of parameters so every gate slice in the kernel
    #      is lane-aligned; padded hidden units provably stay exactly zero.
    w_ih_p = _pad_gate_dim(jnp.asarray(w_ih, jnp.float32), H, H_pad)     # (4H_pad, d)
    if w_ih_p.shape[1] != D_in:          # layer > 0: input is the padded hidden state
        w_ih_p = jnp.pad(w_ih_p, ((0, 0), (0, D_in - w_ih_p.shape[1])))
    w_hh_p = _pad_gate_dim(jnp.asarray(w_hh, jnp.float32), H, H_pad)     # (4H_pad, H)
    w_hh_p = jnp.pad(w_hh_p, ((0, 0), (0, H_pad - H)))                   # (4H_pad, H_pad)
    bias_p = _pad_gate_dim(jnp.asarray(b_ih, jnp.float32)
                           + jnp.asarray(b_hh, jnp.float32), H, H_pad)   # (4H_pad,)

    # ---- hoisted input projection: ONE 2-D bf16 GEMM with f32 accumulation,
    #      bias folded in; stored as bf16 so the kernel streams half the bytes.
    x2 = x.reshape(S * B_pad, D_in).astype(jnp.bfloat16)
    gates_x = jnp.dot(x2, w_ih_p.T.astype(jnp.bfloat16),
                      preferred_element_type=jnp.float32) + bias_p[None, :]
    gates_x = gates_x.reshape(S, B_pad, G).astype(jnp.bfloat16)

    whh_t = w_hh_p.T.astype(jnp.bfloat16)                                # (H_pad, 4H_pad)

    # ---- batch blocking: two blocks when the batch is big enough so v7x's two
    #      TensorCores each take half ('parallel' axis); single block otherwise.
    if B_pad > 16 and B_pad % 32 == 0:
        b_blk = B_pad // 2
    else:
        b_blk = B_pad
    n_b = B_pad // b_blk

    # ---- time chunking derived from a generation-safe VMEM budget.
    t_chunk = _pick_t_chunk(S, b_blk, H_pad, return_sequence, vmem_budget_bytes)
    n_chunks = pl.cdiv(S, t_chunk)
    S_pad = n_chunks * t_chunk
    if S_pad != S:
        gates_x = jnp.pad(gates_x, ((0, S_pad - S), (0, 0), (0, 0)))

    needed = (2 * t_chunk * b_blk * G * 2                                # gx (double-buffered)
              + (2 * t_chunk * b_blk * H_pad * 2 if return_sequence else 0)
              + H_pad * G * 2                                            # resident W_hh copy
              + 4 * b_blk * H_pad * 4)                                   # h/c state + h_n block
    vmem_limit = int(min(60 * 1024 * 1024, max(2 * needed, 20 * 1024 * 1024)))

    kernel = functools.partial(_lstm_recurrence_kernel, seq_len=S,
                               t_chunk=t_chunk, hidden_pad=H_pad,
                               return_sequence=return_sequence)

    hn_spec = pl.BlockSpec((b_blk, H_pad), lambda b, c: (b, 0))
    if return_sequence:
        out_shape = (jax.ShapeDtypeStruct((S_pad, B_pad, H_pad), jnp.bfloat16),
                     jax.ShapeDtypeStruct((B_pad, H_pad), jnp.float32))
        out_specs = [pl.BlockSpec((t_chunk, b_blk, H_pad), lambda b, c: (c, b, 0)),
                     hn_spec]
    else:
        # last layer: only the final hidden state is materialized.
        out_shape = jax.ShapeDtypeStruct((B_pad, H_pad), jnp.float32)
        out_specs = hn_spec

    result = pl.pallas_call(
        kernel,
        out_shape=out_shape,
        grid_spec=pltpu.PrefetchScalarGridSpec(
            num_scalar_prefetch=0,
            grid=(n_b, n_chunks),
            in_specs=[
                pl.BlockSpec((t_chunk, b_blk, G), lambda b, c: (c, b, 0)),  # gates_x chunk
                pl.BlockSpec(memory_space=pl.ANY),    # W_hh^T stays in HBM; copied once
            ],
            out_specs=out_specs,
            scratch_shapes=[
                pltpu.VMEM((H_pad, G), jnp.bfloat16),     # single-buffered W_hh^T copy
                pltpu.VMEM((b_blk, H_pad), jnp.float32),  # h state (persists across chunks)
                pltpu.VMEM((b_blk, H_pad), jnp.float32),  # c state
            ],
        ),
        compiler_params=pltpu.CompilerParams(
            dimension_semantics=("parallel", "arbitrary"),   # batch blocks ||, time sequential
            vmem_limit_bytes=vmem_limit),
    )(gates_x, whh_t)

    if return_sequence:
        seq, h_n = result
        return seq[:S], h_n
    return None, result


def simple_lstm_encoder(x, params):
    """Pallas equivalent of SimpleLSTMEncoder.forward.
    x: (seq_len, batch, input_dim). params: list of per-layer weight dicts.
    Returns [h_n[layer] for layer in range(num_layers)], each (batch, hidden_dim)."""
    S, B, _ = x.shape
    H = params[0]["w_hh"].shape[1]
    # sublane-align the batch (16 for the bf16 streams); padded rows are sliced off.
    B_pad = 16 if B <= 16 else _round_up(B, 32)
    layer_in = jnp.pad(jnp.asarray(x, jnp.float32), ((0, 0), (0, B_pad - B), (0, 0)))

    h_list = []
    n_layers = len(params)
    for li, p in enumerate(params):
        last = li == n_layers - 1
        seq, h_n = lstm_layer(layer_in, p["w_ih"], p["w_hh"], p["b_ih"], p["b_hh"],
                              return_sequence=not last)
        h_list.append(h_n[:B, :H])     # drop batch/hidden padding; f32
        layer_in = seq
    # TODO(synk): fuse the next layer's input projection into the recurrent
    # kernel's per-chunk epilogue (keeping the (t_chunk,B,H) intermediate in
    # VMEM, never round-tripping HBM), and evaluate the gate nonlinearities in
    # bf16 on v6e/v7x (keep f32 on v5e which has no bf16 VPU/EUP).
    return h_list


def init_lstm_params(key, input_dim, hidden_dim, num_layers):
    """Deterministic init matching PyTorch nn.LSTM parameter shapes
    (uniform(-1/sqrt(H), 1/sqrt(H)))."""
    bound = 1.0 / jnp.sqrt(jnp.float32(hidden_dim))
    params = []
    for layer in range(num_layers):
        d_in = input_dim if layer == 0 else hidden_dim
        key, k1, k2, k3, k4 = jax.random.split(key, 5)
        params.append({
            "w_ih": jax.random.uniform(k1, (4 * hidden_dim, d_in), jnp.float32, -bound, bound),
            "w_hh": jax.random.uniform(k2, (4 * hidden_dim, hidden_dim), jnp.float32, -bound, bound),
            "b_ih": jax.random.uniform(k3, (4 * hidden_dim,), jnp.float32, -bound, bound),
            "b_hh": jax.random.uniform(k4, (4 * hidden_dim,), jnp.float32, -bound, bound),
        })
    return params


def _reference_lstm(x, params):
    """Pure-JAX f32 reference (lax.scan) with PyTorch LSTM semantics."""
    def one_layer(xs, p):
        H = p["w_hh"].shape[1]
        B = xs.shape[1]
        wih_t, whh_t = p["w_ih"].T, p["w_hh"].T
        b = p["b_ih"] + p["b_hh"]

        def step(carry, x_t):
            h, c = carry
            g = x_t @ wih_t + h @ whh_t + b
            i = jax.nn.sigmoid(g[:, 0 * H:1 * H])
            f = jax.nn.sigmoid(g[:, 1 * H:2 * H])
            gg = jnp.tanh(g[:, 2 * H:3 * H])
            o = jax.nn.sigmoid(g[:, 3 * H:4 * H])
            c = f * c + i * gg
            h = o * jnp.tanh(c)
            return (h, c), h

        init = (jnp.zeros((B, H), jnp.float32), jnp.zeros((B, H), jnp.float32))
        (h_n, _), outs = jax.lax.scan(step, init, xs)
        return outs, h_n

    h_list, layer_in = [], x
    for p in params:
        layer_in, h_n = one_layer(layer_in, p)
        h_list.append(h_n)
    return h_list


if __name__ == "__main__":
    seq_len, batch, input_dim, hidden_dim, num_layers = 8, 2, 4, 32, 2

    key = jax.random.PRNGKey(0)
    key, kx = jax.random.split(key)
    x = jax.random.normal(kx, (seq_len, batch, input_dim), jnp.float32)

    params = init_lstm_params(key, input_dim, hidden_dim, num_layers)

    h_list = simple_lstm_encoder(x, params)
    h_list = [jax.block_until_ready(h) for h in h_list]

    h_ref = _reference_lstm(x, params)
    for got, ref in zip(h_list, h_ref):
        assert got.shape == (batch, hidden_dim)
        err = float(jnp.max(jnp.abs(got - ref)))
        # bf16 gate streams / recurrent weights => relaxed tolerance vs f32 reference
        assert err < 5e-2, f"mismatch vs JAX reference (max abs err {err})"

    print("KERNEL_OK")
</pallas_src>

<mosaic_0001>
module attributes {stable_mosaic.version = 11 : i64} {
  func.func @_lstm_recurrence_kernel(%arg0: i32, %arg1: i32, %arg2: memref<8x16x512xbf16, #tpu.memory_space<vmem>>, %arg3: memref<128x512xbf16, #tpu.memory_space<any>>, %arg4: memref<8x16x128xbf16, #tpu.memory_space<vmem>>, %arg5: memref<16x128xf32, #tpu.memory_space<vmem>>, %arg6: memref<128x512xbf16, #tpu.memory_space<vmem>>, %arg7: memref<16x128xf32, #tpu.memory_space<vmem>>, %arg8: memref<16x128xf32, #tpu.memory_space<vmem>>) attributes {dimension_semantics = [#tpu.dimension_semantics<parallel>, #tpu.dimension_semantics<arbitrary>], iteration_bounds = array<i64: 1, 1>, scalar_prefetch = 0 : i64, scratch_operands = 3 : i64, tpu.core_type = #tpu.core_type<tc>, window_params = [{transform_indices = @transform_0, window_bounds = array<i64: 8, 16, 512>}, {}, {transform_indices = @transform_2, window_bounds = array<i64: 8, 16, 128>}, {transform_indices = @transform_3, window_bounds = array<i64: 16, 128>}]} {
    %c0_i32 = arith.constant 0 : i32
    %0 = arith.cmpi eq, %arg1, %c0_i32 : i32
    %1 = arith.extui %0 : i1 to i32
    %c0_i32_0 = arith.constant 0 : i32
    %2 = arith.cmpi ne, %1, %c0_i32_0 : i32
    scf.if %2 {
      "tpu.region"() ({
        %366 = tpu.sem_alloc : memref<!tpu.dma_semaphore, #tpu.memory_space<semaphore_mem>>
        tpu.enqueue_dma source(%arg3 : memref<128x512xbf16, #tpu.memory_space<any>>) target(%arg6 : memref<128x512xbf16, #tpu.memory_space<vmem>>) target_semaphore(%366 : memref<!tpu.dma_semaphore, #tpu.memory_space<semaphore_mem>>)
        tpu.wait_dma2 semaphore(%366 : memref<!tpu.dma_semaphore, #tpu.memory_space<semaphore_mem>>) src(%arg3 : memref<128x512xbf16, #tpu.memory_space<any>>) dst(%arg6 : memref<128x512xbf16, #tpu.memory_space<vmem>>)
        tpu.yield
      }) : () -> ()
      %cst_138 = arith.constant 0.000000e+00 : f32
      %362 = vector.broadcast %cst_138 : f32 to vector<16x128xf32>
      %c0_139 = arith.constant 0 : index
      %c0_140 = arith.constant 0 : index
      %363 = vector.load %arg7[%c0_139, %c0_140] : memref<16x128xf32, #tpu.memory_space<vmem>>, vector<16x128xf32>
      tpu.vector_store %arg7[%c0_139, %c0_140], %362 {strides = array<i32>} : memref<16x128xf32, #tpu.memory_space<vmem>>, vector<16x128xf32>,
      %cst_141 = arith.constant 0.000000e+00 : f32
      %364 = vector.broadcast %cst_141 : f32 to vector<16x128xf32>
      %c0_142 = arith.constant 0 : index
      %c0_143 = arith.constant 0 : index
      %365 = vector.load %arg8[%c0_142, %c0_143] : memref<16x128xf32, #tpu.memory_space<vmem>>, vector<16x128xf32>
      tpu.vector_store %arg8[%c0_142, %c0_143], %364 {strides = array<i32>} : memref<16x128xf32, #tpu.memory_space<vmem>>, vector<16x128xf32>,
    } else {
    }
    %c0 = arith.constant 0 : index
    %c0_1 = arith.constant 0 : index
    %3 = vector.load %arg7[%c0, %c0_1] : memref<16x128xf32, #tpu.memory_space<vmem>>, vector<16x128xf32>
    %c0_2 = arith.constant 0 : index
    %c0_3 = arith.constant 0 : index
    %4 = vector.load %arg8[%c0_2, %c0_3] : memref<16x128xf32, #tpu.memory_space<vmem>>, vector<16x128xf32>
    %c0_i32_4 = arith.constant 0 : i32
    %5 = arith.index_cast %c0_i32_4 : i32 to index
    %c0_5 = arith.constant 0 : index
    %c0_6 = arith.constant 0 : index
    %6 = vector.load %arg2[%5, %c0_5, %c0_6] : memref<8x16x512xbf16, #tpu.memory_space<vmem>>, vector<1x16x512xbf16>
    %7 = vector.shape_cast %6 : vector<1x16x512xbf16> to vector<16x512xbf16>
    %8 = arith.extf %7 : vector<16x512xbf16> to vector<16x512xf32>
    %9 = arith.truncf %3 : vector<16x128xf32> to vector<16x128xbf16>
    %c0_7 = arith.constant 0 : index
    %c0_8 = arith.constant 0 : index
    %10 = vector.load %arg6[%c0_7, %c0_8] : memref<128x512xbf16, #tpu.memory_space<vmem>>, vector<128x512xbf16>
    %cst = arith.constant dense<0.000000e+00> : vector<16x512xf32>
    %11 = tpu.matmul %9, %10, %cst {dimension_numbers = #tpu.dot_dimension_numbers<[1], [0], [0], [1], [0, 0, 1, 1], [], []>} : vector<16x128xbf16>, vector<128x512xbf16>, vector<16x512xf32> -> vector<16x512xf32>
    %12 = arith.addf %8, %11 : vector<16x512xf32>
    %13 = vector.extract_strided_slice %12 {offsets = [0, 0], sizes = [16, 128], strides = [1, 1]} : vector<16x512xf32> to vector<16x128xf32>
    %cst_9 = arith.constant 5.000000e-01 : f32
    %14 = vector.broadcast %cst_9 : f32 to vector<16x128xf32>
    %15 = arith.mulf %14, %13 : vector<16x128xf32>
    %16 = math.tanh %15 : vector<16x128xf32>
    %cst_10 = arith.constant 5.000000e-01 : f32
    %17 = vector.broadcast %cst_10 : f32 to vector<16x128xf32>
    %18 = arith.mulf %17, %16 : vector<16x128xf32>
    %cst_11 = arith.constant 5.000000e-01 : f32
    %19 = vector.broadcast %cst_11 : f32 to vector<16x128xf32>
    %20 = arith.addf %18, %19 : vector<16x128xf32>
    %21 = vector.extract_strided_slice %12 {offsets = [0, 128], sizes = [16, 128], strides = [1, 1]} : vector<16x512xf32> to vector<16x128xf32>
    %cst_12 = arith.constant 5.000000e-01 : f32
    %22 = vector.broadcast %cst_12 : f32 to vector<16x128xf32>
    %23 = arith.mulf %22, %21 : vector<16x128xf32>
    %24 = math.tanh %23 : vector<16x128xf32>
    %cst_13 = arith.constant 5.000000e-01 : f32
    %25 = vector.broadcast %cst_13 : f32 to vector<16x128xf32>
    %26 = arith.mulf %25, %24 : vector<16x128xf32>
    %cst_14 = arith.constant 5.000000e-01 : f32
    %27 = vector.broadcast %cst_14 : f32 to vector<16x128xf32>
    %28 = arith.addf %26, %27 : vector<16x128xf32>
    %29 = vector.extract_strided_slice %12 {offsets = [0, 256], sizes = [16, 128], strides = [1, 1]} : vector<16x512xf32> to vector<16x128xf32>
    %30 = math.tanh %29 : vector<16x128xf32>
    %31 = vector.extract_strided_slice %12 {offsets = [0, 384], sizes = [16, 128], strides = [1, 1]} : vector<16x512xf32> to vector<16x128xf32>
    %cst_15 = arith.constant 5.000000e-01 : f32
    %32 = vector.broadcast %cst_15 : f32 to vector<16x128xf32>
    %33 = arith.mulf %32, %31 : vector<16x128xf32>
    %34 = math.tanh %33 : vector<16x128xf32>
    %cst_16 = arith.constant 5.000000e-01 : f32
    %35 = vector.broadcast %cst_16 : f32 to vector<16x128xf32>
    %36 = arith.mulf %35, %34 : vector<16x128xf32>
    %cst_17 = arith.constant 5.000000e-01 : f32
    %37 = vector.broadcast %cst_17 : f32 to vector<16x128xf32>
    %38 = arith.addf %36, %37 : vector<16x128xf32>
    %39 = arith.mulf %28, %4 : vector<16x128xf32>
    %40 = arith.mulf %20, %30 : vector<16x128xf32>
    %41 = arith.addf %39, %40 : vector<16x128xf32>
    %42 = math.tanh %41 : vector<16x128xf32>
    %43 = arith.mulf %38, %42 : vector<16x128xf32>
    %44 = arith.truncf %43 : vector<16x128xf32> to vector<16x128xbf16>
    %45 = arith.index_cast %c0_i32_4 : i32 to index
    %c0_18 = arith.constant 0 : index
    %c0_19 = arith.constant 0 : index
    %46 = vector.load %arg4[%45, %c0_18, %c0_19] : memref<8x16x128xbf16, #tpu.memory_space<vmem>>, vector<1x16x128xbf16>
    %47 = vector.shape_cast %46 : vector<1x16x128xbf16> to vector<16x128xbf16>
    %48 = vector.shape_cast %44 : vector<16x128xbf16> to vector<1x16x128xbf16>
    tpu.vector_store %arg4[%45, %c0_18, %c0_19], %48 {strides = array<i32>} : memref<8x16x128xbf16, #tpu.memory_space<vmem>>, vector<1x16x128xbf16>,
    %c1_i32 = arith.constant 1 : i32
    %49 = arith.index_cast %c1_i32 : i32 to index
    %c0_20 = arith.constant 0 : index
    %c0_21 = arith.constant 0 : index
    %50 = vector.load %arg2[%49, %c0_20, %c0_21] : memref<8x16x512xbf16, #tpu.memory_space<vmem>>, vector<1x16x512xbf16>
    %51 = vector.shape_cast %50 : vector<1x16x512xbf16> to vector<16x512xbf16>
    %52 = arith.extf %51 : vector<16x512xbf16> to vector<16x512xf32>
    %53 = arith.truncf %43 : vector<16x128xf32> to vector<16x128xbf16>
    %c0_22 = arith.constant 0 : index
    %c0_23 = arith.constant 0 : index
    %54 = vector.load %arg6[%c0_22, %c0_23] : memref<128x512xbf16, #tpu.memory_space<vmem>>, vector<128x512xbf16>
    %cst_24 = arith.constant dense<0.000000e+00> : vector<16x512xf32>
    %55 = tpu.matmul %53, %54, %cst_24 {dimension_numbers = #tpu.dot_dimension_numbers<[1], [0], [0], [1], [0, 0, 1, 1], [], []>} : vector<16x128xbf16>, vector<128x512xbf16>, vector<16x512xf32> -> vector<16x512xf32>
    %56 = arith.addf %52, %55 : vector<16x512xf32>
    %57 = vector.extract_strided_slice %56 {offsets = [0, 0], sizes = [16, 128], strides = [1, 1]} : vector<16x512xf32> to vector<16x128xf32>
    %cst_25 = arith.constant 5.000000e-01 : f32
    %58 = vector.broadcast %cst_25 : f32 to vector<16x128xf32>
    %59 = arith.mulf %58, %57 : vector<16x128xf32>
    %60 = math.tanh %59 : vector<16x128xf32>
    %cst_26 = arith.constant 5.000000e-01 : f32
    %61 = vector.broadcast %cst_26 : f32 to vector<16x128xf32>
    %62 = arith.mulf %61, %60 : vector<16x128xf32>
    %cst_27 = arith.constant 5.000000e-01 : f32
    %63 = vector.broadcast %cst_27 : f32 to vector<16x128xf32>
    %64 = arith.addf %62, %63 : vector<16x128xf32>
    %65 = vector.extract_strided_slice %56 {offsets = [0, 128], sizes = [16, 128], strides = [1, 1]} : vector<16x512xf32> to vector<16x128xf32>
    %cst_28 = arith.constant 5.000000e-01 : f32
    %66 = vector.broadcast %cst_28 : f32 to vector<16x128xf32>
    %67 = arith.mulf %66, %65 : vector<16x128xf32>
    %68 = math.tanh %67 : vector<16x128xf32>
    %cst_29 = arith.constant 5.000000e-01 : f32
    %69 = vector.broadcast %cst_29 : f32 to vector<16x128xf32>
    %70 = arith.mulf %69, %68 : vector<16x128xf32>
    %cst_30 = arith.constant 5.000000e-01 : f32
    %71 = vector.broadcast %cst_30 : f32 to vector<16x128xf32>
    %72 = arith.addf %70, %71 : vector<16x128xf32>
    %73 = vector.extract_strided_slice %56 {offsets = [0, 256], sizes = [16, 128], strides = [1, 1]} : vector<16x512xf32> to vector<16x128xf32>
    %74 = math.tanh %73 : vector<16x128xf32>
    %75 = vector.extract_strided_slice %56 {offsets = [0, 384], sizes = [16, 128], strides = [1, 1]} : vector<16x512xf32> to vector<16x128xf32>
    %cst_31 = arith.constant 5.000000e-01 : f32
    %76 = vector.broadcast %cst_31 : f32 to vector<16x128xf32>
    %77 = arith.mulf %76, %75 : vector<16x128xf32>
    %78 = math.tanh %77 : vector<16x128xf32>
    %cst_32 = arith.constant 5.000000e-01 : f32
    %79 = vector.broadcast %cst_32 : f32 to vector<16x128xf32>
    %80 = arith.mulf %79, %78 : vector<16x128xf32>
    %cst_33 = arith.constant 5.000000e-01 : f32
    %81 = vector.broadcast %cst_33 : f32 to vector<16x128xf32>
    %82 = arith.addf %80, %81 : vector<16x128xf32>
    %83 = arith.mulf %72, %41 : vector<16x128xf32>
    %84 = arith.mulf %64, %74 : vector<16x128xf32>
    %85 = arith.addf %83, %84 : vector<16x128xf32>
    %86 = math.tanh %85 : vector<16x128xf32>
    %87 = arith.mulf %82, %86 : vector<16x128xf32>
    %88 = arith.truncf %87 : vector<16x128xf32> to vector<16x128xbf16>
    %89 = arith.index_cast %c1_i32 : i32 to index
    %c0_34 = arith.constant 0 : index
    %c0_35 = arith.constant 0 : index
    %90 = vector.load %arg4[%89, %c0_34, %c0_35] : memref<8x16x128xbf16, #tpu.memory_space<vmem>>, vector<1x16x128xbf16>
    %91 = vector.shape_cast %90 : vector<1x16x128xbf16> to vector<16x128xbf16>
    %92 = vector.shape_cast %88 : vector<16x128xbf16> to vector<1x16x128xbf16>
    tpu.vector_store %arg4[%89, %c0_34, %c0_35], %92 {strides = array<i32>} : memref<8x16x128xbf16, #tpu.memory_space<vmem>>, vector<1x16x128xbf16>,
    %c2_i32 = arith.constant 2 : i32
    %93 = arith.index_cast %c2_i32 : i32 to index
    %c0_36 = arith.constant 0 : index
    %c0_37 = arith.constant 0 : index
    %94 = vector.load %arg2[%93, %c0_36, %c0_37] : memref<8x16x512xbf16, #tpu.memory_space<vmem>>, vector<1x16x512xbf16>
    %95 = vector.shape_cast %94 : vector<1x16x512xbf16> to vector<16x512xbf16>
    %96 = arith.extf %95 : vector<16x512xbf16> to vector<16x512xf32>
    %97 = arith.truncf %87 : vector<16x128xf32> to vector<16x128xbf16>
    %c0_38 = arith.constant 0 : index
    %c0_39 = arith.constant 0 : index
    %98 = vector.load %arg6[%c0_38, %c0_39] : memref<128x512xbf16, #tpu.memory_space<vmem>>, vector<128x512xbf16>
    %cst_40 = arith.constant dense<0.000000e+00> : vector<16x512xf32>
    %99 = tpu.matmul %97, %98, %cst_40 {dimension_numbers = #tpu.dot_dimension_numbers<[1], [0], [0], [1], [0, 0, 1, 1], [], []>} : vector<16x128xbf16>, vector<128x512xbf16>, vector<16x512xf32> -> vector<16x512xf32>
    %100 = arith.addf %96, %99 : vector<16x512xf32>
    %101 = vector.extract_strided_slice %100 {offsets = [0, 0], sizes = [16, 128], strides = [1, 1]} : vector<16x512xf32> to vector<16x128xf32>
    %cst_41 = arith.constant 5.000000e-01 : f32
    %102 = vector.broadcast %cst_41 : f32 to vector<16x128xf32>
    %103 = arith.mulf %102, %101 : vector<16x128xf32>
    %104 = math.tanh %103 : vector<16x128xf32>
    %cst_42 = arith.constant 5.000000e-01 : f32
    %105 = vector.broadcast %cst_42 : f32 to vector<16x128xf32>
    %106 = arith.mulf %105, %104 : vector<16x128xf32>
    %cst_43 = arith.constant 5.000000e-01 : f32
    %107 = vector.broadcast %cst_43 : f32 to vector<16x128xf32>
    %108 = arith.addf %106, %107 : vector<16x128xf32>
    %109 = vector.extract_strided_slice %100 {offsets = [0, 128], sizes = [16, 128], strides = [1, 1]} : vector<16x512xf32> to vector<16x128xf32>
    %cst_44 = arith.constant 5.000000e-01 : f32
    %110 = vector.broadcast %cst_44 : f32 to vector<16x128xf32>
    %111 = arith.mulf %110, %109 : vector<16x128xf32>
    %112 = math.tanh %111 : vector<16x128xf32>
    %cst_45 = arith.constant 5.000000e-01 : f32
    %113 = vector.broadcast %cst_45 : f32 to vector<16x128xf32>
    %114 = arith.mulf %113, %112 : vector<16x128xf32>
    %cst_46 = arith.constant 5.000000e-01 : f32
    %115 = vector.broadcast %cst_46 : f32 to vector<16x128xf32>
    %116 = arith.addf %114, %115 : vector<16x128xf32>
    %117 = vector.extract_strided_slice %100 {offsets = [0, 256], sizes = [16, 128], strides = [1, 1]} : vector<16x512xf32> to vector<16x128xf32>
    %118 = math.tanh %117 : vector<16x128xf32>
    %119 = vector.extract_strided_slice %100 {offsets = [0, 384], sizes = [16, 128], strides = [1, 1]} : vector<16x512xf32> to vector<16x128xf32>
    %cst_47 = arith.constant 5.000000e-01 : f32
    %120 = vector.broadcast %cst_47 : f32 to vector<16x128xf32>
    %121 = arith.mulf %120, %119 : vector<16x128xf32>
    %122 = math.tanh %121 : vector<16x128xf32>
    %cst_48 = arith.constant 5.000000e-01 : f32
    %123 = vector.broadcast %cst_48 : f32 to vector<16x128xf32>
    %124 = arith.mulf %123, %122 : vector<16x128xf32>
    %cst_49 = arith.constant 5.000000e-01 : f32
    %125 = vector.broadcast %cst_49 : f32 to vector<16x128xf32>
    %126 = arith.addf %124, %125 : vector<16x128xf32>
    %127 = arith.mulf %116, %85 : vector<16x128xf32>
    %128 = arith.mulf %108, %118 : vector<16x128xf32>
    %129 = arith.addf %127, %128 : vector<16x128xf32>
    %130 = math.tanh %129 : vector<16x128xf32>
    %131 = arith.mulf %126, %130 : vector<16x128xf32>
    %132 = arith.truncf %131 : vector<16x128xf32> to vector<16x128xbf16>
    %133 = arith.index_cast %c2_i32 : i32 to index
    %c0_50 = arith.constant 0 : index
    %c0_51 = arith.constant 0 : index
    %134 = vector.load %arg4[%133, %c0_50, %c0_51] : memref<8x16x128xbf16, #tpu.memory_space<vmem>>, vector<1x16x128xbf16>
    %135 = vector.shape_cast %134 : vector<1x16x128xbf16> to vector<16x128xbf16>
    %136 = vector.shape_cast %132 : vector<16x128xbf16> to vector<1x16x128xbf16>
    tpu.vector_store %arg4[%133, %c0_50, %c0_51], %136 {strides = array<i32>} : memref<8x16x128xbf16, #tpu.memory_space<vmem>>, vector<1x16x128xbf16>,
    %c3_i32 = arith.constant 3 : i32
    %137 = arith.index_cast %c3_i32 : i32 to index
    %c0_52 = arith.constant 0 : index
    %c0_53 = arith.constant 0 : index
    %138 = vector.load %arg2[%137, %c0_52, %c0_53] : memref<8x16x512xbf16, #tpu.memory_space<vmem>>, vector<1x16x512xbf16>
    %139 = vector.shape_cast %138 : vector<1x16x512xbf16> to vector<16x512xbf16>
    %140 = arith.extf %139 : vector<16x512xbf16> to vector<16x512xf32>
    %141 = arith.truncf %131 : vector<16x128xf32> to vector<16x128xbf16>
    %c0_54 = arith.constant 0 : index
    %c0_55 = arith.constant 0 : index
    %142 = vector.load %arg6[%c0_54, %c0_55] : memref<128x512xbf16, #tpu.memory_space<vmem>>, vector<128x512xbf16>
    %cst_56 = arith.constant dense<0.000000e+00> : vector<16x512xf32>
    %143 = tpu.matmul %141, %142, %cst_56 {dimension_numbers = #tpu.dot_dimension_numbers<[1], [0], [0], [1], [0, 0, 1, 1], [], []>} : vector<16x128xbf16>, vector<128x512xbf16>, vector<16x512xf32> -> vector<16x512xf32>
    %144 = arith.addf %140, %143 : vector<16x512xf32>
    %145 = vector.extract_strided_slice %144 {offsets = [0, 0], sizes = [16, 128], strides = [1, 1]} : vector<16x512xf32> to vector<16x128xf32>
    %cst_57 = arith.constant 5.000000e-01 : f32
    %146 = vector.broadcast %cst_57 : f32 to vector<16x128xf32>
    %147 = arith.mulf %146, %145 : vector<16x128xf32>
    %148 = math.tanh %147 : vector<16x128xf32>
    %cst_58 = arith.constant 5.000000e-01 : f32
    %149 = vector.broadcast %cst_58 : f32 to vector<16x128xf32>
    %150 = arith.mulf %149, %148 : vector<16x128xf32>
    %cst_59 = arith.constant 5.000000e-01 : f32
    %151 = vector.broadcast %cst_59 : f32 to vector<16x128xf32>
    %152 = arith.addf %150, %151 : vector<16x128xf32>
    %153 = vector.extract_strided_slice %144 {offsets = [0, 128], sizes = [16, 128], strides = [1, 1]} : vector<16x512xf32> to vector<16x128xf32>
    %cst_60 = arith.constant 5.000000e-01 : f32
    %154 = vector.broadcast %cst_60 : f32 to vector<16x128xf32>
    %155 = arith.mulf %154, %153 : vector<16x128xf32>
    %156 = math.tanh %155 : vector<16x128xf32>
    %cst_61 = arith.constant 5.000000e-01 : f32
    %157 = vector.broadcast %cst_61 : f32 to vector<16x128xf32>
    %158 = arith.mulf %157, %156 : vector<16x128xf32>
    %cst_62 = arith.constant 5.000000e-01 : f32
    %159 = vector.broadcast %cst_62 : f32 to vector<16x128xf32>
    %160 = arith.addf %158, %159 : vector<16x128xf32>
    %161 = vector.extract_strided_slice %144 {offsets = [0, 256], sizes = [16, 128], strides = [1, 1]} : vector<16x512xf32> to vector<16x128xf32>
    %162 = math.tanh %161 : vector<16x128xf32>
    %163 = vector.extract_strided_slice %144 {offsets = [0, 384], sizes = [16, 128], strides = [1, 1]} : vector<16x512xf32> to vector<16x128xf32>
    %cst_63 = arith.constant 5.000000e-01 : f32
    %164 = vector.broadcast %cst_63 : f32 to vector<16x128xf32>
    %165 = arith.mulf %164, %163 : vector<16x128xf32>
    %166 = math.tanh %165 : vector<16x128xf32>
    %cst_64 = arith.constant 5.000000e-01 : f32
    %167 = vector.broadcast %cst_64 : f32 to vector<16x128xf32>
    %168 = arith.mulf %167, %166 : vector<16x128xf32>
    %cst_65 = arith.constant 5.000000e-01 : f32
    %169 = vector.broadcast %cst_65 : f32 to vector<16x128xf32>
    %170 = arith.addf %168, %169 : vector<16x128xf32>
    %171 = arith.mulf %160, %129 : vector<16x128xf32>
    %172 = arith.mulf %152, %162 : vector<16x128xf32>
    %173 = arith.addf %171, %172 : vector<16x128xf32>
    %174 = math.tanh %173 : vector<16x128xf32>
    %175 = arith.mulf %170, %174 : vector<16x128xf32>
    %176 = arith.truncf %175 : vector<16x128xf32> to vector<16x128xbf16>
    %177 = arith.index_cast %c3_i32 : i32 to index
    %c0_66 = arith.constant 0 : index
    %c0_67 = arith.constant 0 : index
    %178 = vector.load %arg4[%177, %c0_66, %c0_67] : memref<8x16x128xbf16, #tpu.memory_space<vmem>>, vector<1x16x128xbf16>
    %179 = vector.shape_cast %178 : vector<1x16x128xbf16> to vector<16x128xbf16>
    %180 = vector.shape_cast %176 : vector<16x128xbf16> to vector<1x16x128xbf16>
    tpu.vector_store %arg4[%177, %c0_66, %c0_67], %180 {strides = array<i32>} : memref<8x16x128xbf16, #tpu.memory_space<vmem>>, vector<1x16x128xbf16>,
    %c4_i32 = arith.constant 4 : i32
    %181 = arith.index_cast %c4_i32 : i32 to index
    %c0_68 = arith.constant 0 : index
    %c0_69 = arith.constant 0 : index
    %182 = vector.load %arg2[%181, %c0_68, %c0_69] : memref<8x16x512xbf16, #tpu.memory_space<vmem>>, vector<1x16x512xbf16>
    %183 = vector.shape_cast %182 : vector<1x16x512xbf16> to vector<16x512xbf16>
    %184 = arith.extf %183 : vector<16x512xbf16> to vector<16x512xf32>
    %185 = arith.truncf %175 : vector<16x128xf32> to vector<16x128xbf16>
    %c0_70 = arith.constant 0 : index
    %c0_71 = arith.constant 0 : index
    %186 = vector.load %arg6[%c0_70, %c0_71] : memref<128x512xbf16, #tpu.memory_space<vmem>>, vector<128x512xbf16>
    %cst_72 = arith.constant dense<0.000000e+00> : vector<16x512xf32>
    %187 = tpu.matmul %185, %186, %cst_72 {dimension_numbers = #tpu.dot_dimension_numbers<[1], [0], [0], [1], [0, 0, 1, 1], [], []>} : vector<16x128xbf16>, vector<128x512xbf16>, vector<16x512xf32> -> vector<16x512xf32>
    %188 = arith.addf %184, %187 : vector<16x512xf32>
    %189 = vector.extract_strided_slice %188 {offsets = [0, 0], sizes = [16, 128], strides = [1, 1]} : vector<16x512xf32> to vector<16x128xf32>
    %cst_73 = arith.constant 5.000000e-01 : f32
    %190 = vector.broadcast %cst_73 : f32 to vector<16x128xf32>
    %191 = arith.mulf %190, %189 : vector<16x128xf32>
    %192 = math.tanh %191 : vector<16x128xf32>
    %cst_74 = arith.constant 5.000000e-01 : f32
    %193 = vector.broadcast %cst_74 : f32 to vector<16x128xf32>
    %194 = arith.mulf %193, %192 : vector<16x128xf32>
    %cst_75 = arith.constant 5.000000e-01 : f32
    %195 = vector.broadcast %cst_75 : f32 to vector<16x128xf32>
    %196 = arith.addf %194, %195 : vector<16x128xf32>
    %197 = vector.extract_strided_slice %188 {offsets = [0, 128], sizes = [16, 128], strides = [1, 1]} : vector<16x512xf32> to vector<16x128xf32>
    %cst_76 = arith.constant 5.000000e-01 : f32
    %198 = vector.broadcast %cst_76 : f32 to vector<16x128xf32>
    %199 = arith.mulf %198, %197 : vector<16x128xf32>
    %200 = math.tanh %199 : vector<16x128xf32>
    %cst_77 = arith.constant 5.000000e-01 : f32
    %201 = vector.broadcast %cst_77 : f32 to vector<16x128xf32>
    %202 = arith.mulf %201, %200 : vector<16x128xf32>
    %cst_78 = arith.constant 5.000000e-01 : f32
    %203 = vector.broadcast %cst_78 : f32 to vector<16x128xf32>
    %204 = arith.addf %202, %203 : vector<16x128xf32>
    %205 = vector.extract_strided_slice %188 {offsets = [0, 256], sizes = [16, 128], strides = [1, 1]} : vector<16x512xf32> to vector<16x128xf32>
    %206 = math.tanh %205 : vector<16x128xf32>
    %207 = vector.extract_strided_slice %188 {offsets = [0, 384], sizes = [16, 128], strides = [1, 1]} : vector<16x512xf32> to vector<16x128xf32>
    %cst_79 = arith.constant 5.000000e-01 : f32
    %208 = vector.broadcast %cst_79 : f32 to vector<16x128xf32>
    %209 = arith.mulf %208, %207 : vector<16x128xf32>
    %210 = math.tanh %209 : vector<16x128xf32>
    %cst_80 = arith.constant 5.000000e-01 : f32
    %211 = vector.broadcast %cst_80 : f32 to vector<16x128xf32>
    %212 = arith.mulf %211, %210 : vector<16x128xf32>
    %cst_81 = arith.constant 5.000000e-01 : f32
    %213 = vector.broadcast %cst_81 : f32 to vector<16x128xf32>
    %214 = arith.addf %212, %213 : vector<16x128xf32>
    %215 = arith.mulf %204, %173 : vector<16x128xf32>
    %216 = arith.mulf %196, %206 : vector<16x128xf32>
    %217 = arith.addf %215, %216 : vector<16x128xf32>
    %218 = math.tanh %217 : vector<16x128xf32>
    %219 = arith.mulf %214, %218 : vector<16x128xf32>
    %220 = arith.truncf %219 : vector<16x128xf32> to vector<16x128xbf16>
    %221 = arith.index_cast %c4_i32 : i32 to index
    %c0_82 = arith.constant 0 : index
    %c0_83 = arith.constant 0 : index
    %222 = vector.load %arg4[%221, %c0_82, %c0_83] : memref<8x16x128xbf16, #tpu.memory_space<vmem>>, vector<1x16x128xbf16>
    %223 = vector.shape_cast %222 : vector<1x16x128xbf16> to vector<16x128xbf16>
    %224 = vector.shape_cast %220 : vector<16x128xbf16> to vector<1x16x128xbf16>
    tpu.vector_store %arg4[%221, %c0_82, %c0_83], %224 {strides = array<i32>} : memref<8x16x128xbf16, #tpu.memory_space<vmem>>, vector<1x16x128xbf16>,
    %c5_i32 = arith.constant 5 : i32
    %225 = arith.index_cast %c5_i32 : i32 to index
    %c0_84 = arith.constant 0 : index
    %c0_85 = arith.constant 0 : index
    %226 = vector.load %arg2[%225, %c0_84, %c0_85] : memref<8x16x512xbf16, #tpu.memory_space<vmem>>, vector<1x16x512xbf16>
    %227 = vector.shape_cast %226 : vector<1x16x512xbf16> to vector<16x512xbf16>
    %228 = arith.extf %227 : vector<16x512xbf16> to vector<16x512xf32>
    %229 = arith.truncf %219 : vector<16x128xf32> to vector<16x128xbf16>
    %c0_86 = arith.constant 0 : index
    %c0_87 = arith.constant 0 : index
    %230 = vector.load %arg6[%c0_86, %c0_87] : memref<128x512xbf16, #tpu.memory_space<vmem>>, vector<128x512xbf16>
    %cst_88 = arith.constant dense<0.000000e+00> : vector<16x512xf32>
    %231 = tpu.matmul %229, %230, %cst_88 {dimension_numbers = #tpu.dot_dimension_numbers<[1], [0], [0], [1], [0, 0, 1, 1], [], []>} : vector<16x128xbf16>, vector<128x512xbf16>, vector<16x512xf32> -> vector<16x512xf32>
    %232 = arith.addf %228, %231 : vector<16x512xf32>
    %233 = vector.extract_strided_slice %232 {offsets = [0, 0], sizes = [16, 128], strides = [1, 1]} : vector<16x512xf32> to vector<16x128xf32>
    %cst_89 = arith.constant 5.000000e-01 : f32
    %234 = vector.broadcast %cst_89 : f32 to vector<16x128xf32>
    %235 = arith.mulf %234, %233 : vector<16x128xf32>
    %236 = math.tanh %235 : vector<16x128xf32>
    %cst_90 = arith.constant 5.000000e-01 : f32
    %237 = vector.broadcast %cst_90 : f32 to vector<16x128xf32>
    %238 = arith.mulf %237, %236 : vector<16x128xf32>
    %cst_91 = arith.constant 5.000000e-01 : f32
    %239 = vector.broadcast %cst_91 : f32 to vector<16x128xf32>
    %240 = arith.addf %238, %239 : vector<16x128xf32>
    %241 = vector.extract_strided_slice %232 {offsets = [0, 128], sizes = [16, 128], strides = [1, 1]} : vector<16x512xf32> to vector<16x128xf32>
    %cst_92 = arith.constant 5.000000e-01 : f32
    %242 = vector.broadcast %cst_92 : f32 to vector<16x128xf32>
    %243 = arith.mulf %242, %241 : vector<16x128xf32>
    %244 = math.tanh %243 : vector<16x128xf32>
    %cst_93 = arith.constant 5.000000e-01 : f32
    %245 = vector.broadcast %cst_93 : f32 to vector<16x128xf32>
    %246 = arith.mulf %245, %244 : vector<16x128xf32>
    %cst_94 = arith.constant 5.000000e-01 : f32
    %247 = vector.broadcast %cst_94 : f32 to vector<16x128xf32>
    %248 = arith.addf %246, %247 : vector<16x128xf32>
    %249 = vector.extract_strided_slice %232 {offsets = [0, 256], sizes = [16, 128], strides = [1, 1]} : vector<16x512xf32> to vector<16x128xf32>
    %250 = math.tanh %249 : vector<16x128xf32>
    %251 = vector.extract_strided_slice %232 {offsets = [0, 384], sizes = [16, 128], strides = [1, 1]} : vector<16x512xf32> to vector<16x128xf32>
    %cst_95 = arith.constant 5.000000e-01 : f32
    %252 = vector.broadcast %cst_95 : f32 to vector<16x128xf32>
    %253 = arith.mulf %252, %251 : vector<16x128xf32>
    %254 = math.tanh %253 : vector<16x128xf32>
    %cst_96 = arith.constant 5.000000e-01 : f32
    %255 = vector.broadcast %cst_96 : f32 to vector<16x128xf32>
    %256 = arith.mulf %255, %254 : vector<16x128xf32>
    %cst_97 = arith.constant 5.000000e-01 : f32
    %257 = vector.broadcast %cst_97 : f32 to vector<16x128xf32>
    %258 = arith.addf %256, %257 : vector<16x128xf32>
    %259 = arith.mulf %248, %217 : vector<16x128xf32>
    %260 = arith.mulf %240, %250 : vector<16x128xf32>
    %261 = arith.addf %259, %260 : vector<16x128xf32>
    %262 = math.tanh %261 : vector<16x128xf32>
    %263 = arith.mulf %258, %262 : vector<16x128xf32>
    %264 = arith.truncf %263 : vector<16x128xf32> to vector<16x128xbf16>
    %265 = arith.index_cast %c5_i32 : i32 to index
    %c0_98 = arith.constant 0 : index
    %c0_99 = arith.constant 0 : index
    %266 = vector.load %arg4[%265, %c0_98, %c0_99] : memref<8x16x128xbf16, #tpu.memory_space<vmem>>, vector<1x16x128xbf16>
    %267 = vector.shape_cast %266 : vector<1x16x128xbf16> to vector<16x128xbf16>
    %268 = vector.shape_cast %264 : vector<16x128xbf16> to vector<1x16x128xbf16>
    tpu.vector_store %arg4[%265, %c0_98, %c0_99], %268 {strides = array<i32>} : memref<8x16x128xbf16, #tpu.memory_space<vmem>>, vector<1x16x128xbf16>,
    %c6_i32 = arith.constant 6 : i32
    %269 = arith.index_cast %c6_i32 : i32 to index
    %c0_100 = arith.constant 0 : index
    %c0_101 = arith.constant 0 : index
    %270 = vector.load %arg2[%269, %c0_100, %c0_101] : memref<8x16x512xbf16, #tpu.memory_space<vmem>>, vector<1x16x512xbf16>
    %271 = vector.shape_cast %270 : vector<1x16x512xbf16> to vector<16x512xbf16>
    %272 = arith.extf %271 : vector<16x512xbf16> to vector<16x512xf32>
    %273 = arith.truncf %263 : vector<16x128xf32> to vector<16x128xbf16>
    %c0_102 = arith.constant 0 : index
    %c0_103 = arith.constant 0 : index
    %274 = vector.load %arg6[%c0_102, %c0_103] : memref<128x512xbf16, #tpu.memory_space<vmem>>, vector<128x512xbf16>
    %cst_104 = arith.constant dense<0.000000e+00> : vector<16x512xf32>
    %275 = tpu.matmul %273, %274, %cst_104 {dimension_numbers = #tpu.dot_dimension_numbers<[1], [0], [0], [1], [0, 0, 1, 1], [], []>} : vector<16x128xbf16>, vector<128x512xbf16>, vector<16x512xf32> -> vector<16x512xf32>
    %276 = arith.addf %272, %275 : vector<16x512xf32>
    %277 = vector.extract_strided_slice %276 {offsets = [0, 0], sizes = [16, 128], strides = [1, 1]} : vector<16x512xf32> to vector<16x128xf32>
    %cst_105 = arith.constant 5.000000e-01 : f32
    %278 = vector.broadcast %cst_105 : f32 to vector<16x128xf32>
    %279 = arith.mulf %278, %277 : vector<16x128xf32>
    %280 = math.tanh %279 : vector<16x128xf32>
    %cst_106 = arith.constant 5.000000e-01 : f32
    %281 = vector.broadcast %cst_106 : f32 to vector<16x128xf32>
    %282 = arith.mulf %281, %280 : vector<16x128xf32>
    %cst_107 = arith.constant 5.000000e-01 : f32
    %283 = vector.broadcast %cst_107 : f32 to vector<16x128xf32>
    %284 = arith.addf %282, %283 : vector<16x128xf32>
    %285 = vector.extract_strided_slice %276 {offsets = [0, 128], sizes = [16, 128], strides = [1, 1]} : vector<16x512xf32> to vector<16x128xf32>
    %cst_108 = arith.constant 5.000000e-01 : f32
    %286 = vector.broadcast %cst_108 : f32 to vector<16x128xf32>
    %287 = arith.mulf %286, %285 : vector<16x128xf32>
    %288 = math.tanh %287 : vector<16x128xf32>
    %cst_109 = arith.constant 5.000000e-01 : f32
    %289 = vector.broadcast %cst_109 : f32 to vector<16x128xf32>
    %290 = arith.mulf %289, %288 : vector<16x128xf32>
    %cst_110 = arith.constant 5.000000e-01 : f32
    %291 = vector.broadcast %cst_110 : f32 to vector<16x128xf32>
    %292 = arith.addf %290, %291 : vector<16x128xf32>
    %293 = vector.extract_strided_slice %276 {offsets = [0, 256], sizes = [16, 128], strides = [1, 1]} : vector<16x512xf32> to vector<16x128xf32>
    %294 = math.tanh %293 : vector<16x128xf32>
    %295 = vector.extract_strided_slice %276 {offsets = [0, 384], sizes = [16, 128], strides = [1, 1]} : vector<16x512xf32> to vector<16x128xf32>
    %cst_111 = arith.constant 5.000000e-01 : f32
    %296 = vector.broadcast %cst_111 : f32 to vector<16x128xf32>
    %297 = arith.mulf %296, %295 : vector<16x128xf32>
    %298 = math.tanh %297 : vector<16x128xf32>
    %cst_112 = arith.constant 5.000000e-01 : f32
    %299 = vector.broadcast %cst_112 : f32 to vector<16x128xf32>
    %300 = arith.mulf %299, %298 : vector<16x128xf32>
    %cst_113 = arith.constant 5.000000e-01 : f32
    %301 = vector.broadcast %cst_113 : f32 to vector<16x128xf32>
    %302 = arith.addf %300, %301 : vector<16x128xf32>
    %303 = arith.mulf %292, %261 : vector<16x128xf32>
    %304 = arith.mulf %284, %294 : vector<16x128xf32>
    %305 = arith.addf %303, %304 : vector<16x128xf32>
    %306 = math.tanh %305 : vector<16x128xf32>
    %307 = arith.mulf %302, %306 : vector<16x128xf32>
    %308 = arith.truncf %307 : vector<16x128xf32> to vector<16x128xbf16>
    %309 = arith.index_cast %c6_i32 : i32 to index
    %c0_114 = arith.constant 0 : index
    %c0_115 = arith.constant 0 : index
    %310 = vector.load %arg4[%309, %c0_114, %c0_115] : memref<8x16x128xbf16, #tpu.memory_space<vmem>>, vector<1x16x128xbf16>
    %311 = vector.shape_cast %310 : vector<1x16x128xbf16> to vector<16x128xbf16>
    %312 = vector.shape_cast %308 : vector<16x128xbf16> to vector<1x16x128xbf16>
    tpu.vector_store %arg4[%309, %c0_114, %c0_115], %312 {strides = array<i32>} : memref<8x16x128xbf16, #tpu.memory_space<vmem>>, vector<1x16x128xbf16>,
    %c7_i32 = arith.constant 7 : i32
    %313 = arith.index_cast %c7_i32 : i32 to index
    %c0_116 = arith.constant 0 : index
    %c0_117 = arith.constant 0 : index
    %314 = vector.load %arg2[%313, %c0_116, %c0_117] : memref<8x16x512xbf16, #tpu.memory_space<vmem>>, vector<1x16x512xbf16>
    %315 = vector.shape_cast %314 : vector<1x16x512xbf16> to vector<16x512xbf16>
    %316 = arith.extf %315 : vector<16x512xbf16> to vector<16x512xf32>
    %317 = arith.truncf %307 : vector<16x128xf32> to vector<16x128xbf16>
    %c0_118 = arith.constant 0 : index
    %c0_119 = arith.constant 0 : index
    %318 = vector.load %arg6[%c0_118, %c0_119] : memref<128x512xbf16, #tpu.memory_space<vmem>>, vector<128x512xbf16>
    %cst_120 = arith.constant dense<0.000000e+00> : vector<16x512xf32>
    %319 = tpu.matmul %317, %318, %cst_120 {dimension_numbers = #tpu.dot_dimension_numbers<[1], [0], [0], [1], [0, 0, 1, 1], [], []>} : vector<16x128xbf16>, vector<128x512xbf16>, vector<16x512xf32> -> vector<16x512xf32>
    %320 = arith.addf %316, %319 : vector<16x512xf32>
    %321 = vector.extract_strided_slice %320 {offsets = [0, 0], sizes = [16, 128], strides = [1, 1]} : vector<16x512xf32> to vector<16x128xf32>
    %cst_121 = arith.constant 5.000000e-01 : f32
    %322 = vector.broadcast %cst_121 : f32 to vector<16x128xf32>
    %323 = arith.mulf %322, %321 : vector<16x128xf32>
    %324 = math.tanh %323 : vector<16x128xf32>
    %cst_122 = arith.constant 5.000000e-01 : f32
    %325 = vector.broadcast %cst_122 : f32 to vector<16x128xf32>
    %326 = arith.mulf %325, %324 : vector<16x128xf32>
    %cst_123 = arith.constant 5.000000e-01 : f32
    %327 = vector.broadcast %cst_123 : f32 to vector<16x128xf32>
    %328 = arith.addf %326, %327 : vector<16x128xf32>
    %329 = vector.extract_strided_slice %320 {offsets = [0, 128], sizes = [16, 128], strides = [1, 1]} : vector<16x512xf32> to vector<16x128xf32>
    %cst_124 = arith.constant 5.000000e-01 : f32
    %330 = vector.broadcast %cst_124 : f32 to vector<16x128xf32>
    %331 = arith.mulf %330, %329 : vector<16x128xf32>
    %332 = math.tanh %331 : vector<16x128xf32>
    %cst_125 = arith.constant 5.000000e-01 : f32
    %333 = vector.broadcast %cst_125 : f32 to vector<16x128xf32>
    %334 = arith.mulf %333, %332 : vector<16x128xf32>
    %cst_126 = arith.constant 5.000000e-01 : f32
    %335 = vector.broadcast %cst_126 : f32 to vector<16x128xf32>
    %336 = arith.addf %334, %335 : vector<16x128xf32>
    %337 = vector.extract_strided_slice %320 {offsets = [0, 256], sizes = [16, 128], strides = [1, 1]} : vector<16x512xf32> to vector<16x128xf32>
    %338 = math.tanh %337 : vector<16x128xf32>
    %339 = vector.extract_strided_slice %320 {offsets = [0, 384], sizes = [16, 128], strides = [1, 1]} : vector<16x512xf32> to vector<16x128xf32>
    %cst_127 = arith.constant 5.000000e-01 : f32
    %340 = vector.broadcast %cst_127 : f32 to vector<16x128xf32>
    %341 = arith.mulf %340, %339 : vector<16x128xf32>
    %342 = math.tanh %341 : vector<16x128xf32>
    %cst_128 = arith.constant 5.000000e-01 : f32
    %343 = vector.broadcast %cst_128 : f32 to vector<16x128xf32>
    %344 = arith.mulf %343, %342 : vector<16x128xf32>
    %cst_129 = arith.constant 5.000000e-01 : f32
    %345 = vector.broadcast %cst_129 : f32 to vector<16x128xf32>
    %346 = arith.addf %344, %345 : vector<16x128xf32>
    %347 = arith.mulf %336, %305 : vector<16x128xf32>
    %348 = arith.mulf %328, %338 : vector<16x128xf32>
    %349 = arith.addf %347, %348 : vector<16x128xf32>
    %350 = math.tanh %349 : vector<16x128xf32>
    %351 = arith.mulf %346, %350 : vector<16x128xf32>
    %352 = arith.truncf %351 : vector<16x128xf32> to vector<16x128xbf16>
    %353 = arith.index_cast %c7_i32 : i32 to index
    %c0_130 = arith.constant 0 : index
    %c0_131 = arith.constant 0 : index
    %354 = vector.load %arg4[%353, %c0_130, %c0_131] : memref<8x16x128xbf16, #tpu.memory_space<vmem>>, vector<1x16x128xbf16>
    %355 = vector.shape_cast %354 : vector<1x16x128xbf16> to vector<16x128xbf16>
    %356 = vector.shape_cast %352 : vector<16x128xbf16> to vector<1x16x128xbf16>
    tpu.vector_store %arg4[%353, %c0_130, %c0_131], %356 {strides = array<i32>} : memref<8x16x128xbf16, #tpu.memory_space<vmem>>, vector<1x16x128xbf16>,
    %c8_i32 = arith.constant 8 : i32
    %c0_132 = arith.constant 0 : index
    %c0_133 = arith.constant 0 : index
    %357 = vector.load %arg7[%c0_132, %c0_133] : memref<16x128xf32, #tpu.memory_space<vmem>>, vector<16x128xf32>
    tpu.vector_store %arg7[%c0_132, %c0_133], %351 {strides = array<i32>} : memref<16x128xf32, #tpu.memory_space<vmem>>, vector<16x128xf32>,
    %c0_134 = arith.constant 0 : index
    %c0_135 = arith.constant 0 : index
    %358 = vector.load %arg8[%c0_134, %c0_135] : memref<16x128xf32, #tpu.memory_space<vmem>>, vector<16x128xf32>
    tpu.vector_store %arg8[%c0_134, %c0_135], %349 {strides = array<i32>} : memref<16x128xf32, #tpu.memory_space<vmem>>, vector<16x128xf32>,
    %c0_i32_136 = arith.constant 0 : i32
    %359 = arith.cmpi eq, %arg1, %c0_i32_136 : i32
    %360 = arith.extui %359 : i1 to i32
    %c0_i32_137 = arith.constant 0 : i32
    %361 = arith.cmpi ne, %360, %c0_i32_137 : i32
    scf.if %361 {
      %c0_138 = arith.constant 0 : index
      %c0_139 = arith.constant 0 : index
      %362 = vector.load %arg5[%c0_138, %c0_139] : memref<16x128xf32, #tpu.memory_space<vmem>>, vector<16x128xf32>
      tpu.vector_store %arg5[%c0_138, %c0_139], %351 {strides = array<i32>} : memref<16x128xf32, #tpu.memory_space<vmem>>, vector<16x128xf32>,
    } else {
    }
    return
  }
  func.func @transform_0(%arg0: i32, %arg1: i32) -> (i32, i32, i32) {
    %c0_i32 = arith.constant 0 : i32
    %c0_i32_0 = arith.constant 0 : i32
    return %arg1, %arg0, %c0_i32 : i32, i32, i32
  }
  func.func @transform_2(%arg0: i32, %arg1: i32) -> (i32, i32, i32) {
    %c0_i32 = arith.constant 0 : i32
    %c0_i32_0 = arith.constant 0 : i32
    return %arg1, %arg0, %c0_i32 : i32, i32, i32
  }
  func.func @transform_3(%arg0: i32, %arg1: i32) -> (i32, i32) {
    %c0_i32 = arith.constant 0 : i32
    %c0_i32_0 = arith.constant 0 : i32
    return %arg0, %c0_i32 : i32, i32
  }
}

</mosaic_0001>

<llo_original>
// kernel: tpu_custom_call.1
$region0: #{tpu_custom_call.1}
  #allocation0 [shape = 'u32[]', space=smem, size = 0x4, offset = 0x4, fixed_abs, tag = 'smem constant byte address 0x4 - core index']
  #allocation1 [shape = 'u32[144,128]{1,0:T(1,128)}', space=vmem, size = 0x12000, scoped, tag = 'internal scratch']
  #allocation2 [shape = 'bf16[128,512]{1,0:T(16,128)(2,1)}', space=vmem, size = 0x20000, scoped, tag = 'scratch operand']
  #allocation3 [shape = 'f32[16,128]{1,0:T(8,128)}', space=vmem, size = 0x2000, scoped, tag = 'scratch operand']
  #allocation4 [shape = 'f32[16,128]{1,0:T(8,128)}', space=vmem, size = 0x2000, scoped, tag = 'scratch operand']
  #allocation12 [shape = 's32[]', space=sflag, size = 0x4, offset = 0, fixed_abs, tag = 'sflag constant byte address 0x0 - dummy sync flag']
  %s0 = inlined_call_operand.hbm [shape: bf16[8,16,512], index: 0, kind: input, shape index: {}]
  %s1 = inlined_call_operand.hbm [shape: bf16[128,512], index: 1, kind: input, shape index: {}]
  %s2 = inlined_call_operand.hbm [shape: bf16[8,16,128], index: 2, kind: output, shape index: {0}]
  %s3 = inlined_call_operand.hbm [shape: f32[16,128], index: 3, kind: output, shape index: {1}]
  %4 = xla_tuple %s2, %s3
  %s5 = sld [smem:[#allocation0]]
  $region35: #{tpu_custom_call.1} parent=0
    _
  %s7 = ssub.s32 1, %s5
  %s8 = scalar_select 0, %s7, %s5
  $region1: #{tpu_custom_call.1} parent=0
    #allocation5 [shape = 'u8[131072]{0}', space=vmem, size = 0x20000, scoped, tag = 'input window, operand 0, single buffered']
    #allocation6 [shape = 's32[1]{0}', space=sflag, size = 0x4, scoped, tag = 'scoped memory for tpu_custom_call.1']
    #allocation7 [shape = 's32[1]{0}', space=sflag, size = 0x4, scoped, tag = 'scoped memory for tpu_custom_call.1']
    #allocation8 [shape = 'u8[32768]{0}', space=vmem, size = 0x8000, scoped, tag = 'output window, operand 0, single buffered']
    #allocation9 [shape = 'u8[8192]{0}', space=vmem, size = 0x2000, scoped, tag = 'output window, operand 1, single buffered']
    #allocation10 [shape = 's32[1]{0}', space=sflag, size = 0x4, scoped, tag = 'scoped memory for tpu_custom_call.1']
    %9 = vsyncpa [#allocation6], 0
    %10 = vsyncpa [#allocation7], 0
    %11 = vsyncpa [#allocation10], 0
    // Predicated region
    $region2: #{tpu_custom_call.1} parent=1 // pred_check
      _
    $region3: #{tpu_custom_call.1} parent=1 // pred_check_branch
      %13 = sbr.rel (0) target = $region5
    $region4: #{tpu_custom_call.1} parent=1 // pred_region
      %s15 = ssub.s32 4096, 4096
      %16 = vsyncadd [#allocation6], %s15
      %s17 = sshll.u32 [#allocation5], 4
      %s18 = int_to_ptr.vmem [resolvable:$true] %s17
      %23 = dma.hbm_to_vmem [thread:$0]  %s0, 4096, %s18, [#allocation6], 256, 256, 16
    $region5: #{tpu_custom_call.1} parent=1 // pred_fallthru
      _
    // Predicated region
    $region6: #{tpu_custom_call.1} parent=1 // pred_check
      _
    $region7: #{tpu_custom_call.1} parent=1 // pred_check_branch
      %25 = sbr.rel (0) target = $region9
    $region8: #{tpu_custom_call.1} parent=1 // pred_region
      %26 = dma.done [#allocation6], 4096
    $region9: #{tpu_custom_call.1} parent=1 // pred_fallthru
      _
    %p28 = scmp.eq.s32.totalorder 0, 0
    // Predicated region
    $region10: #{tpu_custom_call.1} parent=1 // pred_check
      %p29 = pneg %p28
    $region11: #{tpu_custom_call.1} parent=1 // pred_check_branch
      %31 = sbr.rel (%p29) target = $region13
    $region12: #{tpu_custom_call.1} parent=1 // pred_region
      $region14: #{tpu_custom_call.1} parent=12
        #allocation11 [shape = 's32[1]{0}', space=sflag, size = 0x4, scoped, tag = 'scoped memory for tpu_custom_call.1']
        #allocation13 [shape = 'u32[9]{0}', space=smem, size = 0x24, scoped, tag = 'DMA stride descriptor']
        %s33 = sshll.u32 1, 14
        %s34 = sxor.u32 4294967295, %s33
        %s36 = sld [smem:[#allocation0]]
        %s37 = sadd.s32 2, %s36
        %s39 = sshll.u32 7, 26
        %s40 = sxor.u32 4294967295, %s39
        %s41 = sand.u32 0, %s40
        %s42 = sshll.u32 %s37, 26
        %s43 = sor.u32 %s41, %s42
        %s44 = sshll.u32 [#allocation2], 4
        %s45 = int_to_ptr.vmem [resolvable:$true] %s44
        %48 = sst [smem:[#allocation13]] 512
        %s49 = scalar_lea.smem [#allocation13], 1
        %50 = sst [smem:[%s49]] 512
        %s51 = scalar_lea.smem [#allocation13], 2
        %52 = sst [smem:[%s51]] 4
        %s53 = scalar_lea.smem [#allocation13], 3
        %54 = sst [smem:[%s53]] 64
        %s55 = scalar_lea.smem [#allocation13], 4
        %56 = sst [smem:[%s55]] 128
        %s57 = scalar_lea.smem [#allocation13], 5
        %58 = sst [smem:[%s57]] 2
        %s59 = scalar_lea.smem [#allocation13], 6
        %60 = sst [smem:[%s59]] 256
        %s61 = scalar_lea.smem [#allocation13], 7
        %62 = sst [smem:[%s61]] 64
        %s63 = scalar_lea.smem [#allocation13], 8
        %64 = sst [smem:[%s63]] 4
        %66 = dma.general %s1, 4096, %s45, [#allocation11], [#allocation12], [#allocation13], %s43, 0
        %s67 = smul.u32 4, 16
        %s68 = smul.u32 %s67, 4
        %s69 = sshll.u32 %s68, 4
        %70 = dma.done [#allocation11], %s69
      %71 = vst [vmem:[#allocation3] sm:$0xff] 0.0
      %72 = vst [vmem:[#allocation3 + $0x8] sm:$0xff] 0.0
      %73 = vst [vmem:[#allocation4] sm:$0xff] 0.0
      %74 = vst [vmem:[#allocation4 + $0x8] sm:$0xff] 0.0
    $region13: #{tpu_custom_call.1} parent=1 // pred_fallthru
      _
    %v75 = vld [vmem:[#allocation3] sm:$0xff]
    %v76 = vld [vmem:[#allocation3 + $0x8] sm:$0xff]
    %v77 = vld [vmem:[#allocation4] sm:$0xff]
    %v78 = vld [vmem:[#allocation4 + $0x8] sm:$0xff]
    %v79 = vld [vmem:[#allocation5] sm:$0xff]
    %v80 = vld [vmem:[#allocation5 + $0x8] sm:$0xff]
    %v81 = vld [vmem:[#allocation5 + $0x10] sm:$0xff]
    %v82 = vld [vmem:[#allocation5 + $0x18] sm:$0xff]
    %v83 = vunpack.c.l.bf16 %v79
    %v84 = vunpack.c.h.bf16 %v79
    %v85 = vunpack.c.l.bf16 %v80
    %v86 = vunpack.c.h.bf16 %v80
    %v87 = vunpack.c.l.bf16 %v81
    %v88 = vunpack.c.h.bf16 %v81
    %v89 = vunpack.c.l.bf16 %v82
    %v90 = vunpack.c.h.bf16 %v82
    %v91 = vpack.c.bf16 %v76, %v75
    %v92 = vld [vmem:[#allocation2] sm:$0xff]
    %v93 = vld [vmem:[#allocation2 + $0x8] sm:$0xff]
    %v94 = vld [vmem:[#allocation2 + $0x10] sm:$0xff]
    %v95 = vld [vmem:[#allocation2 + $0x18] sm:$0xff]
    %v96 = vld [vmem:[#allocation2 + $0x20] sm:$0xff]
    %v97 = vld [vmem:[#allocation2 + $0x28] sm:$0xff]
    %v98 = vld [vmem:[#allocation2 + $0x30] sm:$0xff]
    %v99 = vld [vmem:[#allocation2 + $0x38] sm:$0xff]
    %v100 = vld [vmem:[#allocation2 + $0x40] sm:$0xff]
    %v101 = vld [vmem:[#allocation2 + $0x48] sm:$0xff]
    %v102 = vld [vmem:[#allocation2 + $0x50] sm:$0xff]
    %v103 = vld [vmem:[#allocation2 + $0x58] sm:$0xff]
    %v104 = vld [vmem:[#allocation2 + $0x60] sm:$0xff]
    %v105 = vld [vmem:[#allocation2 + $0x68] sm:$0xff]
    %v106 = vld [vmem:[#allocation2 + $0x70] sm:$0xff]
    %v107 = vld [vmem:[#allocation2 + $0x78] sm:$0xff]
    %v108 = vld [vmem:[#allocation2 + $0x80] sm:$0xff]
    %v109 = vld [vmem:[#allocation2 + $0x88] sm:$0xff]
    %v110 = vld [vmem:[#allocation2 + $0x90] sm:$0xff]
    %v111 = vld [vmem:[#allocation2 + $0x98] sm:$0xff]
    %v112 = vld [vmem:[#allocation2 + $0xa0] sm:$0xff]
    %v113 = vld [vmem:[#allocation2 + $0xa8] sm:$0xff]
    %v114 = vld [vmem:[#allocation2 + $0xb0] sm:$0xff]
    %v115 = vld [vmem:[#allocation2 + $0xb8] sm:$0xff]
    %v116 = vld [vmem:[#allocation2 + $0xc0] sm:$0xff]
    %v117 = vld [vmem:[#allocation2 + $0xc8] sm:$0xff]
    %v118 = vld [vmem:[#allocation2 + $0xd0] sm:$0xff]
    %v119 = vld [vmem:[#allocation2 + $0xd8] sm:$0xff]
    %v120 = vld [vmem:[#allocation2 + $0xe0] sm:$0xff]
    %v121 = vld [vmem:[#allocation2 + $0xe8] sm:$0xff]
    %v122 = vld [vmem:[#allocation2 + $0xf0] sm:$0xff]
    %v123 = vld [vmem:[#allocation2 + $0xf8] sm:$0xff]
    %124 = vmatprep.subr.bf16.mxu0 %v93
    %125 = vmatpush1.bf16.msra.mxu0 %v92
    %126 = vmatprep.subr.bf16.mxu0 %v97
    %127 = vmatpush1.bf16.msra.mxu0 %v96
    %128 = vmatprep.subr.bf16.mxu0 %v101
    %129 = vmatpush1.bf16.msra.mxu0 %v100
    %130 = vmatprep.subr.bf16.mxu0 %v105
    %131 = vmatpush1.bf16.msra.mxu0 %v104
    %132 = vmatprep.subr.bf16.mxu0 %v109
    %133 = vmatpush1.bf16.msra.mxu0 %v108
    %134 = vmatprep.subr.bf16.mxu0 %v113
    %135 = vmatpush1.bf16.msra.mxu0 %v112
    %136 = vmatprep.subr.bf16.mxu0 %v117
    %137 = vmatpush1.bf16.msra.mxu0 %v116
    %138 = vmatprep.subr.bf16.mxu0 %v121
    %139 = vmatpush1.bf16.msra.mxu0 %v120
    %140 = vmatprep.subr.bf16.mxu0 0
    %141 = vmatpush1.bf16.msra.mxu0 0
    %142 = vmatprep.subr.bf16.mxu0 0
    %143 = vmatpush1.bf16.msra.mxu0 0
    %144 = vmatprep.subr.bf16.mxu0 0
    %145 = vmatpush1.bf16.msra.mxu0 0
    %146 = vmatprep.subr.bf16.mxu0 0
    %147 = vmatpush1.bf16.msra.mxu0 0
    %148 = vmatprep.subr.bf16.mxu0 0
    %149 = vmatpush1.bf16.msra.mxu0 0
    %150 = vmatprep.subr.bf16.mxu0 0
    %151 = vmatpush1.bf16.msra.mxu0 0
    %152 = vmatprep.subr.bf16.mxu0 0
    %153 = vmatpush1.bf16.msra.mxu0 0
    %154 = vmatprep.subr.bf16.mxu0 0
    %155 = vmatpush1.bf16.msra.mxu0 0
    %156 = vmatprep.mubr.bf16.mxu0 0
    %157 = vmatmul.mubr.bf16.gmra.mrb[0].mxu0 %v91
    %v158 = vpop.f32.mrb[0].mxu0
    %v159 = vadd.f32 0.0, %v158
    %v160 = vpop.f32.mrb[0].mxu0
    %v161 = vadd.f32 0.0, %v160
    %v162 = vpop.f32.mrb[0].mxu0
    %v163 = vadd.f32 0.0, %v162
    %v164 = vpop.f32.mrb[0].mxu0
    %v165 = vadd.f32 0.0, %v164
    %166 = vdwg.mxu0
    %167 = vmatprep.subr.bf16.mxu0 %v95
    %168 = vmatpush1.bf16.msra.mxu0 %v94
    %169 = vmatprep.subr.bf16.mxu0 %v99
    %170 = vmatpush1.bf16.msra.mxu0 %v98
    %171 = vmatprep.subr.bf16.mxu0 %v103
    %172 = vmatpush1.bf16.msra.mxu0 %v102
    %173 = vmatprep.subr.bf16.mxu0 %v107
    %174 = vmatpush1.bf16.msra.mxu0 %v106
    %175 = vmatprep.subr.bf16.mxu0 %v111
    %176 = vmatpush1.bf16.msra.mxu0 %v110
    %177 = vmatprep.subr.bf16.mxu0 %v115
    %178 = vmatpush1.bf16.msra.mxu0 %v114
    %179 = vmatprep.subr.bf16.mxu0 %v119
    %180 = vmatpush1.bf16.msra.mxu0 %v118
    %181 = vmatprep.subr.bf16.mxu0 %v123
    %182 = vmatpush1.bf16.msra.mxu0 %v122
    %183 = vmatprep.subr.bf16.mxu0 0
    %184 = vmatpush1.bf16.msra.mxu0 0
    %185 = vmatprep.subr.bf16.mxu0 0
    %186 = vmatpush1.bf16.msra.mxu0 0
    %187 = vmatprep.subr.bf16.mxu0 0
    %188 = vmatpush1.bf16.msra.mxu0 0
    %189 = vmatprep.subr.bf16.mxu0 0
    %190 = vmatpush1.bf16.msra.mxu0 0
    %191 = vmatprep.subr.bf16.mxu0 0
    %192 = vmatpush1.bf16.msra.mxu0 0
    %193 = vmatprep.subr.bf16.mxu0 0
    %194 = vmatpush1.bf16.msra.mxu0 0
    %195 = vmatprep.subr.bf16.mxu0 0
    %196 = vmatpush1.bf16.msra.mxu0 0
    %197 = vmatprep.subr.bf16.mxu0 0
    %198 = vmatpush1.bf16.msra.mxu0 0
    %199 = vmatprep.mubr.bf16.mxu0 0
    %200 = vmatmul.mubr.bf16.gmra.mrb[0].mxu0 %v91
    %v201 = vpop.f32.mrb[0].mxu0
    %v202 = vadd.f32 0.0, %v201
    %v203 = vpop.f32.mrb[0].mxu0
    %v204 = vadd.f32 0.0, %v203
    %v205 = vpop.f32.mrb[0].mxu0
    %v206 = vadd.f32 0.0, %v205
    %v207 = vpop.f32.mrb[0].mxu0
    %v208 = vadd.f32 0.0, %v207
    %209 = vdwg.mxu0
    %v210 = vadd.f32 %v83, %v159
    %v211 = vadd.f32 %v84, %v161
    %v212 = vadd.f32 %v85, %v202
    %v213 = vadd.f32 %v86, %v204
    %v214 = vadd.f32 %v87, %v163
    %v215 = vadd.f32 %v88, %v165
    %v216 = vadd.f32 %v89, %v206
    %v217 = vadd.f32 %v90, %v208
    %v218 = vmul.f32 %v210, 0.5
    %v219 = vmul.f32 %v214, 0.5
    %v220 = vtanh.pop %v218
    %v221 = vtanh.pop %v219
    %v222 = vmul.f32 %v220, 0.5
    %v223 = vmul.f32 %v221, 0.5
    %v224 = vadd.f32 %v222, 0.5
    %v225 = vadd.f32 %v223, 0.5
    %v226 = vmul.f32 %v211, 0.5
    %v227 = vmul.f32 %v215, 0.5
    %v228 = vtanh.pop %v226
    %v229 = vtanh.pop %v227
    %v230 = vmul.f32 %v228, 0.5
    %v231 = vmul.f32 %v229, 0.5
    %v232 = vadd.f32 %v230, 0.5
    %v233 = vadd.f32 %v231, 0.5
    %v234 = vtanh.pop %v212
    %v235 = vtanh.pop %v216
    %v236 = vmul.f32 %v213, 0.5
    %v237 = vmul.f32 %v217, 0.5
    %v238 = vtanh.pop %v236
    %v239 = vtanh.pop %v237
    %v240 = vmul.f32 %v238, 0.5
    %v241 = vmul.f32 %v239, 0.5
    %v242 = vadd.f32 %v240, 0.5
    %v243 = vadd.f32 %v241, 0.5
    %v244 = vmul.f32 %v232, %v77
    %v245 = vmul.f32 %v233, %v78
    %v246 = vmul.f32 %v224, %v234
    %v247 = vmul.f32 %v225, %v235
    %v248 = vadd.f32 %v244, %v246
    %v249 = vadd.f32 %v245, %v247
    %v250 = vtanh.pop %v248
    %v251 = vtanh.pop %v249
    %v252 = vmul.f32 %v242, %v250
    %v253 = vmul.f32 %v243, %v251
    %v254 = vpack.c.bf16 %v253, %v252
    %v256 = vunpack.c.l.b16 %v254
    %v257 = vunpack.c.h.b16 %v254
    %v258 = vpack.c.b16 %v256, %v256
    %v259 = vpack.c.b16 %v257, %v257
    %262 = vst [vmem:[#allocation8] sm:$0xf] %v258
    %263 = vst [vmem:[#allocation8 + $0x4] sm:$0xf] %v259
    %s264 = scalar_lea.vmem [#allocation5], 32
    %v265 = vld [vmem:[%s264] sm:$0xff]
    %v266 = vld [vmem:[%s264 + $0x8] sm:$0xff]
    %v267 = vld [vmem:[%s264 + $0x10] sm:$0xff]
    %v268 = vld [vmem:[%s264 + $0x18] sm:$0xff]
    %v269 = vunpack.c.l.bf16 %v265
    %v270 = vunpack.c.h.bf16 %v265
    %v271 = vunpack.c.l.bf16 %v266
    %v272 = vunpack.c.h.bf16 %v266
    %v273 = vunpack.c.l.bf16 %v267
    %v274 = vunpack.c.h.bf16 %v267
    %v275 = vunpack.c.l.bf16 %v268
    %v276 = vunpack.c.h.bf16 %v268
    %v277 = vld [vmem:[#allocation2] sm:$0xff]
    %v278 = vld [vmem:[#allocation2 + $0x8] sm:$0xff]
    %v279 = vld [vmem:[#allocation2 + $0x10] sm:$0xff]
    %v280 = vld [vmem:[#allocation2 + $0x18] sm:$0xff]
    %v281 = vld [vmem:[#allocation2 + $0x20] sm:$0xff]
    %v282 = vld [vmem:[#allocation2 + $0x28] sm:$0xff]
    %v283 = vld [vmem:[#allocation2 + $0x30] sm:$0xff]
    %v284 = vld [vmem:[#allocation2 + $0x38] sm:$0xff]
    %v285 = vld [vmem:[#allocation2 + $0x40] sm:$0xff]
    %v286 = vld [vmem:[#allocation2 + $0x48] sm:$0xff]
    %v287 = vld [vmem:[#allocation2 + $0x50] sm:$0xff]
    %v288 = vld [vmem:[#allocation2 + $0x58] sm:$0xff]
    %v289 = vld [vmem:[#allocation2 + $0x60] sm:$0xff]
    %v290 = vld [vmem:[#allocation2 + $0x68] sm:$0xff]
    %v291 = vld [vmem:[#allocation2 + $0x70] sm:$0xff]
    %v292 = vld [vmem:[#allocation2 + $0x78] sm:$0xff]
    %v293 = vld [vmem:[#allocation2 + $0x80] sm:$0xff]
    %v294 = vld [vmem:[#allocation2 + $0x88] sm:$0xff]
    %v295 = vld [vmem:[#allocation2 + $0x90] sm:$0xff]
    %v296 = vld [vmem:[#allocation2 + $0x98] sm:$0xff]
    %v297 = vld [vmem:[#allocation2 + $0xa0] sm:$0xff]
    %v298 = vld [vmem:[#allocation2 + $0xa8] sm:$0xff]
    %v299 = vld [vmem:[#allocation2 + $0xb0] sm:$0xff]
    %v300 = vld [vmem:[#allocation2 + $0xb8] sm:$0xff]
    %v301 = vld [vmem:[#allocation2 + $0xc0] sm:$0xff]
    %v302 = vld [vmem:[#allocation2 + $0xc8] sm:$0xff]
    %v303 = vld [vmem:[#allocation2 + $0xd0] sm:$0xff]
    %v304 = vld [vmem:[#allocation2 + $0xd8] sm:$0xff]
    %v305 = vld [vmem:[#allocation2 + $0xe0] sm:$0xff]
    %v306 = vld [vmem:[#allocation2 + $0xe8] sm:$0xff]
    %v307 = vld [vmem:[#allocation2 + $0xf0] sm:$0xff]
    %v308 = vld [vmem:[#allocation2 + $0xf8] sm:$0xff]
    %309 = vmatprep.subr.bf16.mxu0 %v278
    %310 = vmatpush1.bf16.msra.mxu0 %v277
    %311 = vmatprep.subr.bf16.mxu0 %v282
    %312 = vmatpush1.bf16.msra.mxu0 %v281
    %313 = vmatprep.subr.bf16.mxu0 %v286
    %314 = vmatpush1.bf16.msra.mxu0 %v285
    %315 = vmatprep.subr.bf16.mxu0 %v290
    %316 = vmatpush1.bf16.msra.mxu0 %v289
    %317 = vmatprep.subr.bf16.mxu0 %v294
    %318 = vmatpush1.bf16.msra.mxu0 %v293
    %319 = vmatprep.subr.bf16.mxu0 %v298
    %320 = vmatpush1.bf16.msra.mxu0 %v297
    %321 = vmatprep.subr.bf16.mxu0 %v302
    %322 = vmatpush1.bf16.msra.mxu0 %v301
    %323 = vmatprep.subr.bf16.mxu0 %v306
    %324 = vmatpush1.bf16.msra.mxu0 %v305
    %325 = vmatprep.subr.bf16.mxu0 0
    %326 = vmatpush1.bf16.msra.mxu0 0
    %327 = vmatprep.subr.bf16.mxu0 0
    %328 = vmatpush1.bf16.msra.mxu0 0
    %329 = vmatprep.subr.bf16.mxu0 0
    %330 = vmatpush1.bf16.msra.mxu0 0
    %331 = vmatprep.subr.bf16.mxu0 0
    %332 = vmatpush1.bf16.msra.mxu0 0
    %333 = vmatprep.subr.bf16.mxu0 0
    %334 = vmatpush1.bf16.msra.mxu0 0
    %335 = vmatprep.subr.bf16.mxu0 0
    %336 = vmatpush1.bf16.msra.mxu0 0
    %337 = vmatprep.subr.bf16.mxu0 0
    %338 = vmatpush1.bf16.msra.mxu0 0
    %339 = vmatprep.subr.bf16.mxu0 0
    %340 = vmatpush1.bf16.msra.mxu0 0
    %341 = vmatprep.mubr.bf16.mxu0 0
    %342 = vmatmul.mubr.bf16.gmra.mrb[0].mxu0 %v254
    %v343 = vpop.f32.mrb[0].mxu0
    %v344 = vadd.f32 0.0, %v343
    %v345 = vpop.f32.mrb[0].mxu0
    %v346 = vadd.f32 0.0, %v345
    %v347 = vpop.f32.mrb[0].mxu0
    %v348 = vadd.f32 0.0, %v347
    %v349 = vpop.f32.mrb[0].mxu0
    %v350 = vadd.f32 0.0, %v349
    %351 = vdwg.mxu0
    %352 = vmatprep.subr.bf16.mxu0 %v280
    %353 = vmatpush1.bf16.msra.mxu0 %v279
    %354 = vmatprep.subr.bf16.mxu0 %v284
    %355 = vmatpush1.bf16.msra.mxu0 %v283
    %356 = vmatprep.subr.bf16.mxu0 %v288
    %357 = vmatpush1.bf16.msra.mxu0 %v287
    %358 = vmatprep.subr.bf16.mxu0 %v292
    %359 = vmatpush1.bf16.msra.mxu0 %v291
    %360 = vmatprep.subr.bf16.mxu0 %v296
    %361 = vmatpush1.bf16.msra.mxu0 %v295
    %362 = vmatprep.subr.bf16.mxu0 %v300
    %363 = vmatpush1.bf16.msra.mxu0 %v299
    %364 = vmatprep.subr.bf16.mxu0 %v304
    %365 = vmatpush1.bf16.msra.mxu0 %v303
    %366 = vmatprep.subr.bf16.mxu0 %v308
    %367 = vmatpush1.bf16.msra.mxu0 %v307
    %368 = vmatprep.subr.bf16.mxu0 0
    %369 = vmatpush1.bf16.msra.mxu0 0
    %370 = vmatprep.subr.bf16.mxu0 0
    %371 = vmatpush1.bf16.msra.mxu0 0
    %372 = vmatprep.subr.bf16.mxu0 0
    %373 = vmatpush1.bf16.msra.mxu0 0
    %374 = vmatprep.subr.bf16.mxu0 0
    %375 = vmatpush1.bf16.msra.mxu0 0
    %376 = vmatprep.subr.bf16.mxu0 0
    %377 = vmatpush1.bf16.msra.mxu0 0
    %378 = vmatprep.subr.bf16.mxu0 0
    %379 = vmatpush1.bf16.msra.mxu0 0
    %380 = vmatprep.subr.bf16.mxu0 0
    %381 = vmatpush1.bf16.msra.mxu0 0
    %382 = vmatprep.subr.bf16.mxu0 0
    %383 = vmatpush1.bf16.msra.mxu0 0
    %384 = vmatprep.mubr.bf16.mxu0 0
    %385 = vmatmul.mubr.bf16.gmra.mrb[0].mxu0 %v254
    %v386 = vpop.f32.mrb[0].mxu0
    %v387 = vadd.f32 0.0, %v386
    %v388 = vpop.f32.mrb[0].mxu0
    %v389 = vadd.f32 0.0, %v388
    %v390 = vpop.f32.mrb[0].mxu0
    %v391 = vadd.f32 0.0, %v390
    %v392 = vpop.f32.mrb[0].mxu0
    %v393 = vadd.f32 0.0, %v392
    %394 = vdwg.mxu0
    %v395 = vadd.f32 %v269, %v344
    %v396 = vadd.f32 %v270, %v346
    %v397 = vadd.f32 %v271, %v387
    %v398 = vadd.f32 %v272, %v389
    %v399 = vadd.f32 %v273, %v348
    %v400 = vadd.f32 %v274, %v350
    %v401 = vadd.f32 %v275, %v391
    %v402 = vadd.f32 %v276, %v393
    %v403 = vmul.f32 %v395, 0.5
    %v404 = vmul.f32 %v399, 0.5
    %v405 = vtanh.pop %v403
    %v406 = vtanh.pop %v404
    %v407 = vmul.f32 %v405, 0.5
    %v408 = vmul.f32 %v406, 0.5
    %v409 = vadd.f32 %v407, 0.5
    %v410 = vadd.f32 %v408, 0.5
    %v411 = vmul.f32 %v396, 0.5
    %v412 = vmul.f32 %v400, 0.5
    %v413 = vtanh.pop %v411
    %v414 = vtanh.pop %v412
    %v415 = vmul.f32 %v413, 0.5
    %v416 = vmul.f32 %v414, 0.5
    %v417 = vadd.f32 %v415, 0.5
    %v418 = vadd.f32 %v416, 0.5
    %v419 = vtanh.pop %v397
    %v420 = vtanh.pop %v401
    %v421 = vmul.f32 %v398, 0.5
    %v422 = vmul.f32 %v402, 0.5
    %v423 = vtanh.pop %v421
    %v424 = vtanh.pop %v422
    %v425 = vmul.f32 %v423, 0.5
    %v426 = vmul.f32 %v424, 0.5
    %v427 = vadd.f32 %v425, 0.5
    %v428 = vadd.f32 %v426, 0.5
    %v429 = vmul.f32 %v417, %v248
    %v430 = vmul.f32 %v418, %v249
    %v431 = vmul.f32 %v409, %v419
    %v432 = vmul.f32 %v410, %v420
    %v433 = vadd.f32 %v429, %v431
    %v434 = vadd.f32 %v430, %v432
    %v435 = vtanh.pop %v433
    %v436 = vtanh.pop %v434
    %v437 = vmul.f32 %v427, %v435
    %v438 = vmul.f32 %v428, %v436
    %v439 = vpack.c.bf16 %v438, %v437
    %v441 = vunpack.c.l.b16 %v439
    %v442 = vunpack.c.h.b16 %v439
    %v443 = vpack.c.b16 %v441, %v441
    %v444 = vpack.c.b16 %v442, %v442
    %s447 = scalar_lea.vmem [#allocation8], 8
    %448 = vst [vmem:[%s447] sm:$0xf] %v443
    %449 = vst [vmem:[%s447 + $0x4] sm:$0xf] %v444
    %s450 = scalar_lea.vmem [#allocation5], 64
    %v451 = vld [vmem:[%s450] sm:$0xff]
    %v452 = vld [vmem:[%s450 + $0x8] sm:$0xff]
    %v453 = vld [vmem:[%s450 + $0x10] sm:$0xff]
    %v454 = vld [vmem:[%s450 + $0x18] sm:$0xff]
    %v455 = vunpack.c.l.bf16 %v451
    %v456 = vunpack.c.h.bf16 %v451
    %v457 = vunpack.c.l.bf16 %v452
    %v458 = vunpack.c.h.bf16 %v452
    %v459 = vunpack.c.l.bf16 %v453
    %v460 = vunpack.c.h.bf16 %v453
    %v461 = vunpack.c.l.bf16 %v454
    %v462 = vunpack.c.h.bf16 %v454
    %v463 = vld [vmem:[#allocation2] sm:$0xff]
    %v464 = vld [vmem:[#allocation2 + $0x8] sm:$0xff]
    %v465 = vld [vmem:[#allocation2 + $0x10] sm:$0xff]
    %v466 = vld [vmem:[#allocation2 + $0x18] sm:$0xff]
    %v467 = vld [vmem:[#allocation2 + $0x20] sm:$0xff]
    %v468 = vld [vmem:[#allocation2 + $0x28] sm:$0xff]
    %v469 = vld [vmem:[#allocation2 + $0x30] sm:$0xff]
    %v470 = vld [vmem:[#allocation2 + $0x38] sm:$0xff]
    %v471 = vld [vmem:[#allocation2 + $0x40] sm:$0xff]
    %v472 = vld [vmem:[#allocation2 + $0x48] sm:$0xff]
    %v473 = vld [vmem:[#allocation2 + $0x50] sm:$0xff]
    %v474 = vld [vmem:[#allocation2 + $0x58] sm:$0xff]
    %v475 = vld [vmem:[#allocation2 + $0x60] sm:$0xff]
    %v476 = vld [vmem:[#allocation2 + $0x68] sm:$0xff]
    %v477 = vld [vmem:[#allocation2 + $0x70] sm:$0xff]
    %v478 = vld [vmem:[#allocation2 + $0x78] sm:$0xff]
    %v479 = vld [vmem:[#allocation2 + $0x80] sm:$0xff]
    %v480 = vld [vmem:[#allocation2 + $0x88] sm:$0xff]
    %v481 = vld [vmem:[#allocation2 + $0x90] sm:$0xff]
    %v482 = vld [vmem:[#allocation2 + $0x98] sm:$0xff]
    %v483 = vld [vmem:[#allocation2 + $0xa0] sm:$0xff]
    %v484 = vld [vmem:[#allocation2 + $0xa8] sm:$0xff]
    %v485 = vld [vmem:[#allocation2 + $0xb0] sm:$0xff]
    %v486 = vld [vmem:[#allocation2 + $0xb8] sm:$0xff]
    %v487 = vld [vmem:[#allocation2 + $0xc0] sm:$0xff]
    %v488 = vld [vmem:[#allocation2 + $0xc8] sm:$0xff]
    %v489 = vld [vmem:[#allocation2 + $0xd0] sm:$0xff]
    %v490 = vld [vmem:[#allocation2 + $0xd8] sm:$0xff]
    %v491 = vld [vmem:[#allocation2 + $0xe0] sm:$0xff]
    %v492 = vld [vmem:[#allocation2 + $0xe8] sm:$0xff]
    %v493 = vld [vmem:[#allocation2 + $0xf0] sm:$0xff]
    %v494 = vld [vmem:[#allocation2 + $0xf8] sm:$0xff]
    %495 = vmatprep.subr.bf16.mxu0 %v464
    %496 = vmatpush1.bf16.msra.mxu0 %v463
    %497 = vmatprep.subr.bf16.mxu0 %v468
    %498 = vmatpush1.bf16.msra.mxu0 %v467
    %499 = vmatprep.subr.bf16.mxu0 %v472
    %500 = vmatpush1.bf16.msra.mxu0 %v471
    %501 = vmatprep.subr.bf16.mxu0 %v476
    %502 = vmatpush1.bf16.msra.mxu0 %v475
    %503 = vmatprep.subr.bf16.mxu0 %v480
    %504 = vmatpush1.bf16.msra.mxu0 %v479
    %505 = vmatprep.subr.bf16.mxu0 %v484
    %506 = vmatpush1.bf16.msra.mxu0 %v483
    %507 = vmatprep.subr.bf16.mxu0 %v488
    %508 = vmatpush1.bf16.msra.mxu0 %v487
    %509 = vmatprep.subr.bf16.mxu0 %v492
    %510 = vmatpush1.bf16.msra.mxu0 %v491
    %511 = vmatprep.subr.bf16.mxu0 0
    %512 = vmatpush1.bf16.msra.mxu0 0
    %513 = vmatprep.subr.bf16.mxu0 0
    %514 = vmatpush1.bf16.msra.mxu0 0
    %515 = vmatprep.subr.bf16.mxu0 0
    %516 = vmatpush1.bf16.msra.mxu0 0
    %517 = vmatprep.subr.bf16.mxu0 0
    %518 = vmatpush1.bf16.msra.mxu0 0
    %519 = vmatprep.subr.bf16.mxu0 0
    %520 = vmatpush1.bf16.msra.mxu0 0
    %521 = vmatprep.subr.bf16.mxu0 0
    %522 = vmatpush1.bf16.msra.mxu0 0
    %523 = vmatprep.subr.bf16.mxu0 0
    %524 = vmatpush1.bf16.msra.mxu0 0
    %525 = vmatprep.subr.bf16.mxu0 0
    %526 = vmatpush1.bf16.msra.mxu0 0
    %527 = vmatprep.mubr.bf16.mxu0 0
    %528 = vmatmul.mubr.bf16.gmra.mrb[0].mxu0 %v439
    %v529 = vpop.f32.mrb[0].mxu0
    %v530 = vadd.f32 0.0, %v529
    %v531 = vpop.f32.mrb[0].mxu0
    %v532 = vadd.f32 0.0, %v531
    %v533 = vpop.f32.mrb[0].mxu0
    %v534 = vadd.f32 0.0, %v533
    %v535 = vpop.f32.mrb[0].mxu0
    %v536 = vadd.f32 0.0, %v535
    %537 = vdwg.mxu0
    %538 = vmatprep.subr.bf16.mxu0 %v466
    %539 = vmatpush1.bf16.msra.mxu0 %v465
    %540 = vmatprep.subr.bf16.mxu0 %v470
    %541 = vmatpush1.bf16.msra.mxu0 %v469
    %542 = vmatprep.subr.bf16.mxu0 %v474
    %543 = vmatpush1.bf16.msra.mxu0 %v473
    %544 = vmatprep.subr.bf16.mxu0 %v478
    %545 = vmatpush1.bf16.msra.mxu0 %v477
    %546 = vmatprep.subr.bf16.mxu0 %v482
    %547 = vmatpush1.bf16.msra.mxu0 %v481
    %548 = vmatprep.subr.bf16.mxu0 %v486
    %549 = vmatpush1.bf16.msra.mxu0 %v485
    %550 = vmatprep.subr.bf16.mxu0 %v490
    %551 = vmatpush1.bf16.msra.mxu0 %v489
    %552 = vmatprep.subr.bf16.mxu0 %v494
    %553 = vmatpush1.bf16.msra.mxu0 %v493
    %554 = vmatprep.subr.bf16.mxu0 0
    %555 = vmatpush1.bf16.msra.mxu0 0
    %556 = vmatprep.subr.bf16.mxu0 0
    %557 = vmatpush1.bf16.msra.mxu0 0
    %558 = vmatprep.subr.bf16.mxu0 0
    %559 = vmatpush1.bf16.msra.mxu0 0
    %560 = vmatprep.subr.bf16.mxu0 0
    %561 = vmatpush1.bf16.msra.mxu0 0
    %562 = vmatprep.subr.bf16.mxu0 0
    %563 = vmatpush1.bf16.msra.mxu0 0
    %564 = vmatprep.subr.bf16.mxu0 0
    %565 = vmatpush1.bf16.msra.mxu0 0
    %566 = vmatprep.subr.bf16.mxu0 0
    %567 = vmatpush1.bf16.msra.mxu0 0
    %568 = vmatprep.subr.bf16.mxu0 0
    %569 = vmatpush1.bf16.msra.mxu0 0
    %570 = vmatprep.mubr.bf16.mxu0 0
    %571 = vmatmul.mubr.bf16.gmra.mrb[0].mxu0 %v439
    %v572 = vpop.f32.mrb[0].mxu0
    %v573 = vadd.f32 0.0, %v572
    %v574 = vpop.f32.mrb[0].mxu0
    %v575 = vadd.f32 0.0, %v574
    %v576 = vpop.f32.mrb[0].mxu0
    %v577 = vadd.f32 0.0, %v576
    %v578 = vpop.f32.mrb[0].mxu0
    %v579 = vadd.f32 0.0, %v578
    %580 = vdwg.mxu0
    %v581 = vadd.f32 %v455, %v530
    %v582 = vadd.f32 %v456, %v532
    %v583 = vadd.f32 %v457, %v573
    %v584 = vadd.f32 %v458, %v575
    %v585 = vadd.f32 %v459, %v534
    %v586 = vadd.f32 %v460, %v536
    %v587 = vadd.f32 %v461, %v577
    %v588 = vadd.f32 %v462, %v579
    %v589 = vmul.f32 %v581, 0.5
    %v590 = vmul.f32 %v585, 0.5
    %v591 = vtanh.pop %v589
    %v592 = vtanh.pop %v590
    %v593 = vmul.f32 %v591, 0.5
    %v594 = vmul.f32 %v592, 0.5
    %v595 = vadd.f32 %v593, 0.5
    %v596 = vadd.f32 %v594, 0.5
    %v597 = vmul.f32 %v582, 0.5
    %v598 = vmul.f32 %v586, 0.5
    %v599 = vtanh.pop %v597
    %v600 = vtanh.pop %v598
    %v601 = vmul.f32 %v599, 0.5
    %v602 = vmul.f32 %v600, 0.5
    %v603 = vadd.f32 %v601, 0.5
    %v604 = vadd.f32 %v602, 0.5
    %v605 = vtanh.pop %v583
    %v606 = vtanh.pop %v587
    %v607 = vmul.f32 %v584, 0.5
    %v608 = vmul.f32 %v588, 0.5
    %v609 = vtanh.pop %v607
    %v610 = vtanh.pop %v608
    %v611 = vmul.f32 %v609, 0.5
    %v612 = vmul.f32 %v610, 0.5
    %v613 = vadd.f32 %v611, 0.5
    %v614 = vadd.f32 %v612, 0.5
    %v615 = vmul.f32 %v603, %v433
    %v616 = vmul.f32 %v604, %v434
    %v617 = vmul.f32 %v595, %v605
    %v618 = vmul.f32 %v596, %v606
    %v619 = vadd.f32 %v615, %v617
    %v620 = vadd.f32 %v616, %v618
    %v621 = vtanh.pop %v619
    %v622 = vtanh.pop %v620
    %v623 = vmul.f32 %v613, %v621
    %v624 = vmul.f32 %v614, %v622
    %v625 = vpack.c.bf16 %v624, %v623
    %v627 = vunpack.c.l.b16 %v625
    %v628 = vunpack.c.h.b16 %v625
    %v629 = vpack.c.b16 %v627, %v627
    %v630 = vpack.c.b16 %v628, %v628
    %s633 = scalar_lea.vmem [#allocation8], 16
    %634 = vst [vmem:[%s633] sm:$0xf] %v629
    %635 = vst [vmem:[%s633 + $0x4] sm:$0xf] %v630
    %s636 = scalar_lea.vmem [#allocation5], 96
    %v637 = vld [vmem:[%s636] sm:$0xff]
    %v638 = vld [vmem:[%s636 + $0x8] sm:$0xff]
    %v639 = vld [vmem:[%s636 + $0x10] sm:$0xff]
    %v640 = vld [vmem:[%s636 + $0x18] sm:$0xff]
    %v641 = vunpack.c.l.bf16 %v637
    %v642 = vunpack.c.h.bf16 %v637
    %v643 = vunpack.c.l.bf16 %v638
    %v644 = vunpack.c.h.bf16 %v638
    %v645 = vunpack.c.l.bf16 %v639
    %v646 = vunpack.c.h.bf16 %v639
    %v647 = vunpack.c.l.bf16 %v640
    %v648 = vunpack.c.h.bf16 %v640
    %v649 = vld [vmem:[#allocation2] sm:$0xff]
    %v650 = vld [vmem:[#allocation2 + $0x8] sm:$0xff]
    %v651 = vld [vmem:[#allocation2 + $0x10] sm:$0xff]
    %v652 = vld [vmem:[#allocation2 + $0x18] sm:$0xff]
    %v653 = vld [vmem:[#allocation2 + $0x20] sm:$0xff]
    %v654 = vld [vmem:[#allocation2 + $0x28] sm:$0xff]
    %v655 = vld [vmem:[#allocation2 + $0x30] sm:$0xff]
    %v656 = vld [vmem:[#allocation2 + $0x38] sm:$0xff]
    %v657 = vld [vmem:[#allocation2 + $0x40] sm:$0xff]
    %v658 = vld [vmem:[#allocation2 + $0x48] sm:$0xff]
    %v659 = vld [vmem:[#allocation2 + $0x50] sm:$0xff]
    %v660 = vld [vmem:[#allocation2 + $0x58] sm:$0xff]
    %v661 = vld [vmem:[#allocation2 + $0x60] sm:$0xff]
    %v662 = vld [vmem:[#allocation2 + $0x68] sm:$0xff]
    %v663 = vld [vmem:[#allocation2 + $0x70] sm:$0xff]
    %v664 = vld [vmem:[#allocation2 + $0x78] sm:$0xff]
    %v665 = vld [vmem:[#allocation2 + $0x80] sm:$0xff]
    %v666 = vld [vmem:[#allocation2 + $0x88] sm:$0xff]
    %v667 = vld [vmem:[#allocation2 + $0x90] sm:$0xff]
    %v668 = vld [vmem:[#allocation2 + $0x98] sm:$0xff]
    %v669 = vld [vmem:[#allocation2 + $0xa0] sm:$0xff]
    %v670 = vld [vmem:[#allocation2 + $0xa8] sm:$0xff]
    %v671 = vld [vmem:[#allocation2 + $0xb0] sm:$0xff]
    %v672 = vld [vmem:[#allocation2 + $0xb8] sm:$0xff]
    %v673 = vld [vmem:[#allocation2 + $0xc0] sm:$0xff]
    %v674 = vld [vmem:[#allocation2 + $0xc8] sm:$0xff]
    %v675 = vld [vmem:[#allocation2 + $0xd0] sm:$0xff]
    %v676 = vld [vmem:[#allocation2 + $0xd8] sm:$0xff]
    %v677 = vld [vmem:[#allocation2 + $0xe0] sm:$0xff]
    %v678 = vld [vmem:[#allocation2 + $0xe8] sm:$0xff]
    %v679 = vld [vmem:[#allocation2 + $0xf0] sm:$0xff]
    %v680 = vld [vmem:[#allocation2 + $0xf8] sm:$0xff]
    %681 = vmatprep.subr.bf16.mxu0 %v650
    %682 = vmatpush1.bf16.msra.mxu0 %v649
    %683 = vmatprep.subr.bf16.mxu0 %v654
    %684 = vmatpush1.bf16.msra.mxu0 %v653
    %685 = vmatprep.subr.bf16.mxu0 %v658
    %686 = vmatpush1.bf16.msra.mxu0 %v657
    %687 = vmatprep.subr.bf16.mxu0 %v662
    %688 = vmatpush1.bf16.msra.mxu0 %v661
    %689 = vmatprep.subr.bf16.mxu0 %v666
    %690 = vmatpush1.bf16.msra.mxu0 %v665
    %691 = vmatprep.subr.bf16.mxu0 %v670
    %692 = vmatpush1.bf16.msra.mxu0 %v669
    %693 = vmatprep.subr.bf16.mxu0 %v674
    %694 = vmatpush1.bf16.msra.mxu0 %v673
    %695 = vmatprep.subr.bf16.mxu0 %v678
    %696 = vmatpush1.bf16.msra.mxu0 %v677
    %697 = vmatprep.subr.bf16.mxu0 0
    %698 = vmatpush1.bf16.msra.mxu0 0
    %699 = vmatprep.subr.bf16.mxu0 0
    %700 = vmatpush1.bf16.msra.mxu0 0
    %701 = vmatprep.subr.bf16.mxu0 0
    %702 = vmatpush1.bf16.msra.mxu0 0
    %703 = vmatprep.subr.bf16.mxu0 0
    %704 = vmatpush1.bf16.msra.mxu0 0
    %705 = vmatprep.subr.bf16.mxu0 0
    %706 = vmatpush1.bf16.msra.mxu0 0
    %707 = vmatprep.subr.bf16.mxu0 0
    %708 = vmatpush1.bf16.msra.mxu0 0
    %709 = vmatprep.subr.bf16.mxu0 0
    %710 = vmatpush1.bf16.msra.mxu0 0
    %711 = vmatprep.subr.bf16.mxu0 0
    %712 = vmatpush1.bf16.msra.mxu0 0
    %713 = vmatprep.mubr.bf16.mxu0 0
    %714 = vmatmul.mubr.bf16.gmra.mrb[0].mxu0 %v625
    %v715 = vpop.f32.mrb[0].mxu0
    %v716 = vadd.f32 0.0, %v715
    %v717 = vpop.f32.mrb[0].mxu0
    %v718 = vadd.f32 0.0, %v717
    %v719 = vpop.f32.mrb[0].mxu0
    %v720 = vadd.f32 0.0, %v719
    %v721 = vpop.f32.mrb[0].mxu0
    %v722 = vadd.f32 0.0, %v721
    %723 = vdwg.mxu0
    %724 = vmatprep.subr.bf16.mxu0 %v652
    %725 = vmatpush1.bf16.msra.mxu0 %v651
    %726 = vmatprep.subr.bf16.mxu0 %v656
    %727 = vmatpush1.bf16.msra.mxu0 %v655
    %728 = vmatprep.subr.bf16.mxu0 %v660
    %729 = vmatpush1.bf16.msra.mxu0 %v659
    %730 = vmatprep.subr.bf16.mxu0 %v664
    %731 = vmatpush1.bf16.msra.mxu0 %v663
    %732 = vmatprep.subr.bf16.mxu0 %v668
    %733 = vmatpush1.bf16.msra.mxu0 %v667
    %734 = vmatprep.subr.bf16.mxu0 %v672
    %735 = vmatpush1.bf16.msra.mxu0 %v671
    %736 = vmatprep.subr.bf16.mxu0 %v676
    %737 = vmatpush1.bf16.msra.mxu0 %v675
    %738 = vmatprep.subr.bf16.mxu0 %v680
    %739 = vmatpush1.bf16.msra.mxu0 %v679
    %740 = vmatprep.subr.bf16.mxu0 0
    %741 = vmatpush1.bf16.msra.mxu0 0
    %742 = vmatprep.subr.bf16.mxu0 0
    %743 = vmatpush1.bf16.msra.mxu0 0
    %744 = vmatprep.subr.bf16.mxu0 0
    %745 = vmatpush1.bf16.msra.mxu0 0
    %746 = vmatprep.subr.bf16.mxu0 0
    %747 = vmatpush1.bf16.msra.mxu0 0
    %748 = vmatprep.subr.bf16.mxu0 0
    %749 = vmatpush1.bf16.msra.mxu0 0
    %750 = vmatprep.subr.bf16.mxu0 0
    %751 = vmatpush1.bf16.msra.mxu0 0
    %752 = vmatprep.subr.bf16.mxu0 0
    %753 = vmatpush1.bf16.msra.mxu0 0
    %754 = vmatprep.subr.bf16.mxu0 0
    %755 = vmatpush1.bf16.msra.mxu0 0
    %756 = vmatprep.mubr.bf16.mxu0 0
    %757 = vmatmul.mubr.bf16.gmra.mrb[0].mxu0 %v625
    %v758 = vpop.f32.mrb[0].mxu0
    %v759 = vadd.f32 0.0, %v758
    %v760 = vpop.f32.mrb[0].mxu0
    %v761 = vadd.f32 0.0, %v760
    %v762 = vpop.f32.mrb[0].mxu0
    %v763 = vadd.f32 0.0, %v762
    %v764 = vpop.f32.mrb[0].mxu0
    %v765 = vadd.f32 0.0, %v764
    %766 = vdwg.mxu0
    %v767 = vadd.f32 %v641, %v716
    %v768 = vadd.f32 %v642, %v718
    %v769 = vadd.f32 %v643, %v759
    %v770 = vadd.f32 %v644, %v761
    %v771 = vadd.f32 %v645, %v720
    %v772 = vadd.f32 %v646, %v722
    %v773 = vadd.f32 %v647, %v763
    %v774 = vadd.f32 %v648, %v765
    %v775 = vmul.f32 %v767, 0.5
    %v776 = vmul.f32 %v771, 0.5
    %v777 = vtanh.pop %v775
    %v778 = vtanh.pop %v776
    %v779 = vmul.f32 %v777, 0.5
    %v780 = vmul.f32 %v778, 0.5
    %v781 = vadd.f32 %v779, 0.5
    %v782 = vadd.f32 %v780, 0.5
    %v783 = vmul.f32 %v768, 0.5
    %v784 = vmul.f32 %v772, 0.5
    %v785 = vtanh.pop %v783
    %v786 = vtanh.pop %v784
    %v787 = vmul.f32 %v785, 0.5
    %v788 = vmul.f32 %v786, 0.5
    %v789 = vadd.f32 %v787, 0.5
    %v790 = vadd.f32 %v788, 0.5
    %v791 = vtanh.pop %v769
    %v792 = vtanh.pop %v773
    %v793 = vmul.f32 %v770, 0.5
    %v794 = vmul.f32 %v774, 0.5
    %v795 = vtanh.pop %v793
    %v796 = vtanh.pop %v794
    %v797 = vmul.f32 %v795, 0.5
    %v798 = vmul.f32 %v796, 0.5
    %v799 = vadd.f32 %v797, 0.5
    %v800 = vadd.f32 %v798, 0.5
    %v801 = vmul.f32 %v789, %v619
    %v802 = vmul.f32 %v790, %v620
    %v803 = vmul.f32 %v781, %v791
    %v804 = vmul.f32 %v782, %v792
    %v805 = vadd.f32 %v801, %v803
    %v806 = vadd.f32 %v802, %v804
    %v807 = vtanh.pop %v805
    %v808 = vtanh.pop %v806
    %v809 = vmul.f32 %v799, %v807
    %v810 = vmul.f32 %v800, %v808
    %v811 = vpack.c.bf16 %v810, %v809
    %v813 = vunpack.c.l.b16 %v811
    %v814 = vunpack.c.h.b16 %v811
    %v815 = vpack.c.b16 %v813, %v813
    %v816 = vpack.c.b16 %v814, %v814
    %s819 = scalar_lea.vmem [#allocation8], 24
    %820 = vst [vmem:[%s819] sm:$0xf] %v815
    %821 = vst [vmem:[%s819 + $0x4] sm:$0xf] %v816
    %s822 = scalar_lea.vmem [#allocation5], 128
    %v823 = vld [vmem:[%s822] sm:$0xff]
    %v824 = vld [vmem:[%s822 + $0x8] sm:$0xff]
    %v825 = vld [vmem:[%s822 + $0x10] sm:$0xff]
    %v826 = vld [vmem:[%s822 + $0x18] sm:$0xff]
    %v827 = vunpack.c.l.bf16 %v823
    %v828 = vunpack.c.h.bf16 %v823
    %v829 = vunpack.c.l.bf16 %v824
    %v830 = vunpack.c.h.bf16 %v824
    %v831 = vunpack.c.l.bf16 %v825
    %v832 = vunpack.c.h.bf16 %v825
    %v833 = vunpack.c.l.bf16 %v826
    %v834 = vunpack.c.h.bf16 %v826
    %v835 = vld [vmem:[#allocation2] sm:$0xff]
    %v836 = vld [vmem:[#allocation2 + $0x8] sm:$0xff]
    %v837 = vld [vmem:[#allocation2 + $0x10] sm:$0xff]
    %v838 = vld [vmem:[#allocation2 + $0x18] sm:$0xff]
    %v839 = vld [vmem:[#allocation2 + $0x20] sm:$0xff]
    %v840 = vld [vmem:[#allocation2 + $0x28] sm:$0xff]
    %v841 = vld [vmem:[#allocation2 + $0x30] sm:$0xff]
    %v842 = vld [vmem:[#allocation2 + $0x38] sm:$0xff]
    %v843 = vld [vmem:[#allocation2 + $0x40] sm:$0xff]
    %v844 = vld [vmem:[#allocation2 + $0x48] sm:$0xff]
    %v845 = vld [vmem:[#allocation2 + $0x50] sm:$0xff]
    %v846 = vld [vmem:[#allocation2 + $0x58] sm:$0xff]
    %v847 = vld [vmem:[#allocation2 + $0x60] sm:$0xff]
    %v848 = vld [vmem:[#allocation2 + $0x68] sm:$0xff]
    %v849 = vld [vmem:[#allocation2 + $0x70] sm:$0xff]
    %v850 = vld [vmem:[#allocation2 + $0x78] sm:$0xff]
    %v851 = vld [vmem:[#allocation2 + $0x80] sm:$0xff]
    %v852 = vld [vmem:[#allocation2 + $0x88] sm:$0xff]
    %v853 = vld [vmem:[#allocation2 + $0x90] sm:$0xff]
    %v854 = vld [vmem:[#allocation2 + $0x98] sm:$0xff]
    %v855 = vld [vmem:[#allocation2 + $0xa0] sm:$0xff]
    %v856 = vld [vmem:[#allocation2 + $0xa8] sm:$0xff]
    %v857 = vld [vmem:[#allocation2 + $0xb0] sm:$0xff]
    %v858 = vld [vmem:[#allocation2 + $0xb8] sm:$0xff]
    %v859 = vld [vmem:[#allocation2 + $0xc0] sm:$0xff]
    %v860 = vld [vmem:[#allocation2 + $0xc8] sm:$0xff]
    %v861 = vld [vmem:[#allocation2 + $0xd0] sm:$0xff]
    %v862 = vld [vmem:[#allocation2 + $0xd8] sm:$0xff]
    %v863 = vld [vmem:[#allocation2 + $0xe0] sm:$0xff]
    %v864 = vld [vmem:[#allocation2 + $0xe8] sm:$0xff]
    %v865 = vld [vmem:[#allocation2 + $0xf0] sm:$0xff]
    %v866 = vld [vmem:[#allocation2 + $0xf8] sm:$0xff]
    %867 = vmatprep.subr.bf16.mxu0 %v836
    %868 = vmatpush1.bf16.msra.mxu0 %v835
    %869 = vmatprep.subr.bf16.mxu0 %v840
    %870 = vmatpush1.bf16.msra.mxu0 %v839
    %871 = vmatprep.subr.bf16.mxu0 %v844
    %872 = vmatpush1.bf16.msra.mxu0 %v843
    %873 = vmatprep.subr.bf16.mxu0 %v848
    %874 = vmatpush1.bf16.msra.mxu0 %v847
    %875 = vmatprep.subr.bf16.mxu0 %v852
    %876 = vmatpush1.bf16.msra.mxu0 %v851
    %877 = vmatprep.subr.bf16.mxu0 %v856
    %878 = vmatpush1.bf16.msra.mxu0 %v855
    %879 = vmatprep.subr.bf16.mxu0 %v860
    %880 = vmatpush1.bf16.msra.mxu0 %v859
    %881 = vmatprep.subr.bf16.mxu0 %v864
    %882 = vmatpush1.bf16.msra.mxu0 %v863
    %883 = vmatprep.subr.bf16.mxu0 0
    %884 = vmatpush1.bf16.msra.mxu0 0
    %885 = vmatprep.subr.bf16.mxu0 0
    %886 = vmatpush1.bf16.msra.mxu0 0
    %887 = vmatprep.subr.bf16.mxu0 0
    %888 = vmatpush1.bf16.msra.mxu0 0
    %889 = vmatprep.subr.bf16.mxu0 0
    %890 = vmatpush1.bf16.msra.mxu0 0
    %891 = vmatprep.subr.bf16.mxu0 0
    %892 = vmatpush1.bf16.msra.mxu0 0
    %893 = vmatprep.subr.bf16.mxu0 0
    %894 = vmatpush1.bf16.msra.mxu0 0
    %895 = vmatprep.subr.bf16.mxu0 0
    %896 = vmatpush1.bf16.msra.mxu0 0
    %897 = vmatprep.subr.bf16.mxu0 0
    %898 = vmatpush1.bf16.msra.mxu0 0
    %899 = vmatprep.mubr.bf16.mxu0 0
    %900 = vmatmul.mubr.bf16.gmra.mrb[0].mxu0 %v811
    %v901 = vpop.f32.mrb[0].mxu0
    %v902 = vadd.f32 0.0, %v901
    %v903 = vpop.f32.mrb[0].mxu0
    %v904 = vadd.f32 0.0, %v903
    %v905 = vpop.f32.mrb[0].mxu0
    %v906 = vadd.f32 0.0, %v905
    %v907 = vpop.f32.mrb[0].mxu0
    %v908 = vadd.f32 0.0, %v907
    %909 = vdwg.mxu0
    %910 = vmatprep.subr.bf16.mxu0 %v838
    %911 = vmatpush1.bf16.msra.mxu0 %v837
    %912 = vmatprep.subr.bf16.mxu0 %v842
    %913 = vmatpush1.bf16.msra.mxu0 %v841
    %914 = vmatprep.subr.bf16.mxu0 %v846
    %915 = vmatpush1.bf16.msra.mxu0 %v845
    %916 = vmatprep.subr.bf16.mxu0 %v850
    %917 = vmatpush1.bf16.msra.mxu0 %v849
    %918 = vmatprep.subr.bf16.mxu0 %v854
    %919 = vmatpush1.bf16.msra.mxu0 %v853
    %920 = vmatprep.subr.bf16.mxu0 %v858
    %921 = vmatpush1.bf16.msra.mxu0 %v857
    %922 = vmatprep.subr.bf16.mxu0 %v862
    %923 = vmatpush1.bf16.msra.mxu0 %v861
    %924 = vmatprep.subr.bf16.mxu0 %v866
    %925 = vmatpush1.bf16.msra.mxu0 %v865
    %926 = vmatprep.subr.bf16.mxu0 0
    %927 = vmatpush1.bf16.msra.mxu0 0
    %928 = vmatprep.subr.bf16.mxu0 0
    %929 = vmatpush1.bf16.msra.mxu0 0
    %930 = vmatprep.subr.bf16.mxu0 0
    %931 = vmatpush1.bf16.msra.mxu0 0
    %932 = vmatprep.subr.bf16.mxu0 0
    %933 = vmatpush1.bf16.msra.mxu0 0
    %934 = vmatprep.subr.bf16.mxu0 0
    %935 = vmatpush1.bf16.msra.mxu0 0
    %936 = vmatprep.subr.bf16.mxu0 0
    %937 = vmatpush1.bf16.msra.mxu0 0
    %938 = vmatprep.subr.bf16.mxu0 0
    %939 = vmatpush1.bf16.msra.mxu0 0
    %940 = vmatprep.subr.bf16.mxu0 0
    %941 = vmatpush1.bf16.msra.mxu0 0
    %942 = vmatprep.mubr.bf16.mxu0 0
    %943 = vmatmul.mubr.bf16.gmra.mrb[0].mxu0 %v811
    %v944 = vpop.f32.mrb[0].mxu0
    %v945 = vadd.f32 0.0, %v944
    %v946 = vpop.f32.mrb[0].mxu0
    %v947 = vadd.f32 0.0, %v946
    %v948 = vpop.f32.mrb[0].mxu0
    %v949 = vadd.f32 0.0, %v948
    %v950 = vpop.f32.mrb[0].mxu0
    %v951 = vadd.f32 0.0, %v950
    %952 = vdwg.mxu0
    %v953 = vadd.f32 %v827, %v902
    %v954 = vadd.f32 %v828, %v904
    %v955 = vadd.f32 %v829, %v945
    %v956 = vadd.f32 %v830, %v947
    %v957 = vadd.f32 %v831, %v906
    %v958 = vadd.f32 %v832, %v908
    %v959 = vadd.f32 %v833, %v949
    %v960 = vadd.f32 %v834, %v951
    %v961 = vmul.f32 %v953, 0.5
    %v962 = vmul.f32 %v957, 0.5
    %v963 = vtanh.pop %v961
    %v964 = vtanh.pop %v962
    %v965 = vmul.f32 %v963, 0.5
    %v966 = vmul.f32 %v964, 0.5
    %v967 = vadd.f32 %v965, 0.5
    %v968 = vadd.f32 %v966, 0.5
    %v969 = vmul.f32 %v954, 0.5
    %v970 = vmul.f32 %v958, 0.5
    %v971 = vtanh.pop %v969
    %v972 = vtanh.pop %v970
    %v973 = vmul.f32 %v971, 0.5
    %v974 = vmul.f32 %v972, 0.5
    %v975 = vadd.f32 %v973, 0.5
    %v976 = vadd.f32 %v974, 0.5
    %v977 = vtanh.pop %v955
    %v978 = vtanh.pop %v959
    %v979 = vmul.f32 %v956, 0.5
    %v980 = vmul.f32 %v960, 0.5
    %v981 = vtanh.pop %v979
    %v982 = vtanh.pop %v980
    %v983 = vmul.f32 %v981, 0.5
    %v984 = vmul.f32 %v982, 0.5
    %v985 = vadd.f32 %v983, 0.5
    %v986 = vadd.f32 %v984, 0.5
    %v987 = vmul.f32 %v975, %v805
    %v988 = vmul.f32 %v976, %v806
    %v989 = vmul.f32 %v967, %v977
    %v990 = vmul.f32 %v968, %v978
    %v991 = vadd.f32 %v987, %v989
    %v992 = vadd.f32 %v988, %v990
    %v993 = vtanh.pop %v991
    %v994 = vtanh.pop %v992
    %v995 = vmul.f32 %v985, %v993
    %v996 = vmul.f32 %v986, %v994
    %v997 = vpack.c.bf16 %v996, %v995
    %v999 = vunpack.c.l.b16 %v997
    %v1000 = vunpack.c.h.b16 %v997
    %v1001 = vpack.c.b16 %v999, %v999
    %v1002 = vpack.c.b16 %v1000, %v1000
    %s1005 = scalar_lea.vmem [#allocation8], 32
    %1006 = vst [vmem:[%s1005] sm:$0xf] %v1001
    %1007 = vst [vmem:[%s1005 + $0x4] sm:$0xf] %v1002
    %s1008 = scalar_lea.vmem [#allocation5], 160
    %v1009 = vld [vmem:[%s1008] sm:$0xff]
    %v1010 = vld [vmem:[%s1008 + $0x8] sm:$0xff]
    %v1011 = vld [vmem:[%s1008 + $0x10] sm:$0xff]
    %v1012 = vld [vmem:[%s1008 + $0x18] sm:$0xff]
    %v1013 = vunpack.c.l.bf16 %v1009
    %v1014 = vunpack.c.h.bf16 %v1009
    %v1015 = vunpack.c.l.bf16 %v1010
    %v1016 = vunpack.c.h.bf16 %v1010
    %v1017 = vunpack.c.l.bf16 %v1011
    %v1018 = vunpack.c.h.bf16 %v1011
    %v1019 = vunpack.c.l.bf16 %v1012
    %v1020 = vunpack.c.h.bf16 %v1012
    %v1021 = vld [vmem:[#allocation2] sm:$0xff]
    %v1022 = vld [vmem:[#allocation2 + $0x8] sm:$0xff]
    %v1023 = vld [vmem:[#allocation2 + $0x10] sm:$0xff]
    %v1024 = vld [vmem:[#allocation2 + $0x18] sm:$0xff]
    %v1025 = vld [vmem:[#allocation2 + $0x20] sm:$0xff]
    %v1026 = vld [vmem:[#allocation2 + $0x28] sm:$0xff]
    %v1027 = vld [vmem:[#allocation2 + $0x30] sm:$0xff]
    %v1028 = vld [vmem:[#allocation2 + $0x38] sm:$0xff]
    %v1029 = vld [vmem:[#allocation2 + $0x40] sm:$0xff]
    %v1030 = vld [vmem:[#allocation2 + $0x48] sm:$0xff]
    %v1031 = vld [vmem:[#allocation2 + $0x50] sm:$0xff]
    %v1032 = vld [vmem:[#allocation2 + $0x58] sm:$0xff]
    %v1033 = vld [vmem:[#allocation2 + $0x60] sm:$0xff]
    %v1034 = vld [vmem:[#allocation2 + $0x68] sm:$0xff]
    %v1035 = vld [vmem:[#allocation2 + $0x70] sm:$0xff]
    %v1036 = vld [vmem:[#allocation2 + $0x78] sm:$0xff]
    %v1037 = vld [vmem:[#allocation2 + $0x80] sm:$0xff]
    %v1038 = vld [vmem:[#allocation2 + $0x88] sm:$0xff]
    %v1039 = vld [vmem:[#allocation2 + $0x90] sm:$0xff]
    %v1040 = vld [vmem:[#allocation2 + $0x98] sm:$0xff]
    %v1041 = vld [vmem:[#allocation2 + $0xa0] sm:$0xff]
    %v1042 = vld [vmem:[#allocation2 + $0xa8] sm:$0xff]
    %v1043 = vld [vmem:[#allocation2 + $0xb0] sm:$0xff]
    %v1044 = vld [vmem:[#allocation2 + $0xb8] sm:$0xff]
    %v1045 = vld [vmem:[#allocation2 + $0xc0] sm:$0xff]
    %v1046 = vld [vmem:[#allocation2 + $0xc8] sm:$0xff]
    %v1047 = vld [vmem:[#allocation2 + $0xd0] sm:$0xff]
    %v1048 = vld [vmem:[#allocation2 + $0xd8] sm:$0xff]
    %v1049 = vld [vmem:[#allocation2 + $0xe0] sm:$0xff]
    %v1050 = vld [vmem:[#allocation2 + $0xe8] sm:$0xff]
    %v1051 = vld [vmem:[#allocation2 + $0xf0] sm:$0xff]
    %v1052 = vld [vmem:[#allocation2 + $0xf8] sm:$0xff]
    %1053 = vmatprep.subr.bf16.mxu0 %v1022
    %1054 = vmatpush1.bf16.msra.mxu0 %v1021
    %1055 = vmatprep.subr.bf16.mxu0 %v1026
    %1056 = vmatpush1.bf16.msra.mxu0 %v1025
    %1057 = vmatprep.subr.bf16.mxu0 %v1030
    %1058 = vmatpush1.bf16.msra.mxu0 %v1029
    %1059 = vmatprep.subr.bf16.mxu0 %v1034
    %1060 = vmatpush1.bf16.msra.mxu0 %v1033
    %1061 = vmatprep.subr.bf16.mxu0 %v1038
    %1062 = vmatpush1.bf16.msra.mxu0 %v1037
    %1063 = vmatprep.subr.bf16.mxu0 %v1042
    %1064 = vmatpush1.bf16.msra.mxu0 %v1041
    %1065 = vmatprep.subr.bf16.mxu0 %v1046
    %1066 = vmatpush1.bf16.msra.mxu0 %v1045
    %1067 = vmatprep.subr.bf16.mxu0 %v1050
    %1068 = vmatpush1.bf16.msra.mxu0 %v1049
    %1069 = vmatprep.subr.bf16.mxu0 0
    %1070 = vmatpush1.bf16.msra.mxu0 0
    %1071 = vmatprep.subr.bf16.mxu0 0
    %1072 = vmatpush1.bf16.msra.mxu0 0
    %1073 = vmatprep.subr.bf16.mxu0 0
    %1074 = vmatpush1.bf16.msra.mxu0 0
    %1075 = vmatprep.subr.bf16.mxu0 0
    %1076 = vmatpush1.bf16.msra.mxu0 0
    %1077 = vmatprep.subr.bf16.mxu0 0
    %1078 = vmatpush1.bf16.msra.mxu0 0
    %1079 = vmatprep.subr.bf16.mxu0 0
    %1080 = vmatpush1.bf16.msra.mxu0 0
    %1081 = vmatprep.subr.bf16.mxu0 0
    %1082 = vmatpush1.bf16.msra.mxu0 0
    %1083 = vmatprep.subr.bf16.mxu0 0
    %1084 = vmatpush1.bf16.msra.mxu0 0
    %1085 = vmatprep.mubr.bf16.mxu0 0
    %1086 = vmatmul.mubr.bf16.gmra.mrb[0].mxu0 %v997
    %v1087 = vpop.f32.mrb[0].mxu0
    %v1088 = vadd.f32 0.0, %v1087
    %v1089 = vpop.f32.mrb[0].mxu0
    %v1090 = vadd.f32 0.0, %v1089
    %v1091 = vpop.f32.mrb[0].mxu0
    %v1092 = vadd.f32 0.0, %v1091
    %v1093 = vpop.f32.mrb[0].mxu0
    %v1094 = vadd.f32 0.0, %v1093
    %1095 = vdwg.mxu0
    %1096 = vmatprep.subr.bf16.mxu0 %v1024
    %1097 = vmatpush1.bf16.msra.mxu0 %v1023
    %1098 = vmatprep.subr.bf16.mxu0 %v1028
    %1099 = vmatpush1.bf16.msra.mxu0 %v1027
    %1100 = vmatprep.subr.bf16.mxu0 %v1032
    %1101 = vmatpush1.bf16.msra.mxu0 %v1031
    %1102 = vmatprep.subr.bf16.mxu0 %v1036
    %1103 = vmatpush1.bf16.msra.mxu0 %v1035
    %1104 = vmatprep.subr.bf16.mxu0 %v1040
    %1105 = vmatpush1.bf16.msra.mxu0 %v1039
    %1106 = vmatprep.subr.bf16.mxu0 %v1044
    %1107 = vmatpush1.bf16.msra.mxu0 %v1043
    %1108 = vmatprep.subr.bf16.mxu0 %v1048
    %1109 = vmatpush1.bf16.msra.mxu0 %v1047
    %1110 = vmatprep.subr.bf16.mxu0 %v1052
    %1111 = vmatpush1.bf16.msra.mxu0 %v1051
    %1112 = vmatprep.subr.bf16.mxu0 0
    %1113 = vmatpush1.bf16.msra.mxu0 0
    %1114 = vmatprep.subr.bf16.mxu0 0
    %1115 = vmatpush1.bf16.msra.mxu0 0
    %1116 = vmatprep.subr.bf16.mxu0 0
    %1117 = vmatpush1.bf16.msra.mxu0 0
    %1118 = vmatprep.subr.bf16.mxu0 0
    %1119 = vmatpush1.bf16.msra.mxu0 0
    %1120 = vmatprep.subr.bf16.mxu0 0
    %1121 = vmatpush1.bf16.msra.mxu0 0
    %1122 = vmatprep.subr.bf16.mxu0 0
    %1123 = vmatpush1.bf16.msra.mxu0 0
    %1124 = vmatprep.subr.bf16.mxu0 0
    %1125 = vmatpush1.bf16.msra.mxu0 0
    %1126 = vmatprep.subr.bf16.mxu0 0
    %1127 = vmatpush1.bf16.msra.mxu0 0
    %1128 = vmatprep.mubr.bf16.mxu0 0
    %1129 = vmatmul.mubr.bf16.gmra.mrb[0].mxu0 %v997
    %v1130 = vpop.f32.mrb[0].mxu0
    %v1131 = vadd.f32 0.0, %v1130
    %v1132 = vpop.f32.mrb[0].mxu0
    %v1133 = vadd.f32 0.0, %v1132
    %v1134 = vpop.f32.mrb[0].mxu0
    %v1135 = vadd.f32 0.0, %v1134
    %v1136 = vpop.f32.mrb[0].mxu0
    %v1137 = vadd.f32 0.0, %v1136
    %1138 = vdwg.mxu0
    %v1139 = vadd.f32 %v1013, %v1088
    %v1140 = vadd.f32 %v1014, %v1090
    %v1141 = vadd.f32 %v1015, %v1131
    %v1142 = vadd.f32 %v1016, %v1133
    %v1143 = vadd.f32 %v1017, %v1092
    %v1144 = vadd.f32 %v1018, %v1094
    %v1145 = vadd.f32 %v1019, %v1135
    %v1146 = vadd.f32 %v1020, %v1137
    %v1147 = vmul.f32 %v1139, 0.5
    %v1148 = vmul.f32 %v1143, 0.5
    %v1149 = vtanh.pop %v1147
    %v1150 = vtanh.pop %v1148
    %v1151 = vmul.f32 %v1149, 0.5
    %v1152 = vmul.f32 %v1150, 0.5
    %v1153 = vadd.f32 %v1151, 0.5
    %v1154 = vadd.f32 %v1152, 0.5
    %v1155 = vmul.f32 %v1140, 0.5
    %v1156 = vmul.f32 %v1144, 0.5
    %v1157 = vtanh.pop %v1155
    %v1158 = vtanh.pop %v1156
    %v1159 = vmul.f32 %v1157, 0.5
    %v1160 = vmul.f32 %v1158, 0.5
    %v1161 = vadd.f32 %v1159, 0.5
    %v1162 = vadd.f32 %v1160, 0.5
    %v1163 = vtanh.pop %v1141
    %v1164 = vtanh.pop %v1145
    %v1165 = vmul.f32 %v1142, 0.5
    %v1166 = vmul.f32 %v1146, 0.5
    %v1167 = vtanh.pop %v1165
    %v1168 = vtanh.pop %v1166
    %v1169 = vmul.f32 %v1167, 0.5
    %v1170 = vmul.f32 %v1168, 0.5
    %v1171 = vadd.f32 %v1169, 0.5
    %v1172 = vadd.f32 %v1170, 0.5
    %v1173 = vmul.f32 %v1161, %v991
    %v1174 = vmul.f32 %v1162, %v992
    %v1175 = vmul.f32 %v1153, %v1163
    %v1176 = vmul.f32 %v1154, %v1164
    %v1177 = vadd.f32 %v1173, %v1175
    %v1178 = vadd.f32 %v1174, %v1176
    %v1179 = vtanh.pop %v1177
    %v1180 = vtanh.pop %v1178
    %v1181 = vmul.f32 %v1171, %v1179
    %v1182 = vmul.f32 %v1172, %v1180
    %v1183 = vpack.c.bf16 %v1182, %v1181
    %v1185 = vunpack.c.l.b16 %v1183
    %v1186 = vunpack.c.h.b16 %v1183
    %v1187 = vpack.c.b16 %v1185, %v1185
    %v1188 = vpack.c.b16 %v1186, %v1186
    %s1191 = scalar_lea.vmem [#allocation8], 40
    %1192 = vst [vmem:[%s1191] sm:$0xf] %v1187
    %1193 = vst [vmem:[%s1191 + $0x4] sm:$0xf] %v1188
    %s1194 = scalar_lea.vmem [#allocation5], 192
    %v1195 = vld [vmem:[%s1194] sm:$0xff]
    %v1196 = vld [vmem:[%s1194 + $0x8] sm:$0xff]
    %v1197 = vld [vmem:[%s1194 + $0x10] sm:$0xff]
    %v1198 = vld [vmem:[%s1194 + $0x18] sm:$0xff]
    %v1199 = vunpack.c.l.bf16 %v1195
    %v1200 = vunpack.c.h.bf16 %v1195
    %v1201 = vunpack.c.l.bf16 %v1196
    %v1202 = vunpack.c.h.bf16 %v1196
    %v1203 = vunpack.c.l.bf16 %v1197
    %v1204 = vunpack.c.h.bf16 %v1197
    %v1205 = vunpack.c.l.bf16 %v1198
    %v1206 = vunpack.c.h.bf16 %v1198
    %v1207 = vld [vmem:[#allocation2] sm:$0xff]
    %v1208 = vld [vmem:[#allocation2 + $0x8] sm:$0xff]
    %v1209 = vld [vmem:[#allocation2 + $0x10] sm:$0xff]
    %v1210 = vld [vmem:[#allocation2 + $0x18] sm:$0xff]
    %v1211 = vld [vmem:[#allocation2 + $0x20] sm:$0xff]
    %v1212 = vld [vmem:[#allocation2 + $0x28] sm:$0xff]
    %v1213 = vld [vmem:[#allocation2 + $0x30] sm:$0xff]
    %v1214 = vld [vmem:[#allocation2 + $0x38] sm:$0xff]
    %v1215 = vld [vmem:[#allocation2 + $0x40] sm:$0xff]
    %v1216 = vld [vmem:[#allocation2 + $0x48] sm:$0xff]
    %v1217 = vld [vmem:[#allocation2 + $0x50] sm:$0xff]
    %v1218 = vld [vmem:[#allocation2 + $0x58] sm:$0xff]
    %v1219 = vld [vmem:[#allocation2 + $0x60] sm:$0xff]
    %v1220 = vld [vmem:[#allocation2 + $0x68] sm:$0xff]
    %v1221 = vld [vmem:[#allocation2 + $0x70] sm:$0xff]
    %v1222 = vld [vmem:[#allocation2 + $0x78] sm:$0xff]
    %v1223 = vld [vmem:[#allocation2 + $0x80] sm:$0xff]
    %v1224 = vld [vmem:[#allocation2 + $0x88] sm:$0xff]
    %v1225 = vld [vmem:[#allocation2 + $0x90] sm:$0xff]
    %v1226 = vld [vmem:[#allocation2 + $0x98] sm:$0xff]
    %v1227 = vld [vmem:[#allocation2 + $0xa0] sm:$0xff]
    %v1228 = vld [vmem:[#allocation2 + $0xa8] sm:$0xff]
    %v1229 = vld [vmem:[#allocation2 + $0xb0] sm:$0xff]
    %v1230 = vld [vmem:[#allocation2 + $0xb8] sm:$0xff]
    %v1231 = vld [vmem:[#allocation2 + $0xc0] sm:$0xff]
    %v1232 = vld [vmem:[#allocation2 + $0xc8] sm:$0xff]
    %v1233 = vld [vmem:[#allocation2 + $0xd0] sm:$0xff]
    %v1234 = vld [vmem:[#allocation2 + $0xd8] sm:$0xff]
    %v1235 = vld [vmem:[#allocation2 + $0xe0] sm:$0xff]
    %v1236 = vld [vmem:[#allocation2 + $0xe8] sm:$0xff]
    %v1237 = vld [vmem:[#allocation2 + $0xf0] sm:$0xff]
    %v1238 = vld [vmem:[#allocation2 + $0xf8] sm:$0xff]
    %1239 = vmatprep.subr.bf16.mxu0 %v1208
    %1240 = vmatpush1.bf16.msra.mxu0 %v1207
    %1241 = vmatprep.subr.bf16.mxu0 %v1212
    %1242 = vmatpush1.bf16.msra.mxu0 %v1211
    %1243 = vmatprep.subr.bf16.mxu0 %v1216
    %1244 = vmatpush1.bf16.msra.mxu0 %v1215
    %1245 = vmatprep.subr.bf16.mxu0 %v1220
    %1246 = vmatpush1.bf16.msra.mxu0 %v1219
    %1247 = vmatprep.subr.bf16.mxu0 %v1224
    %1248 = vmatpush1.bf16.msra.mxu0 %v1223
    %1249 = vmatprep.subr.bf16.mxu0 %v1228
    %1250 = vmatpush1.bf16.msra.mxu0 %v1227
    %1251 = vmatprep.subr.bf16.mxu0 %v1232
    %1252 = vmatpush1.bf16.msra.mxu0 %v1231
    %1253 = vmatprep.subr.bf16.mxu0 %v1236
    %1254 = vmatpush1.bf16.msra.mxu0 %v1235
    %1255 = vmatprep.subr.bf16.mxu0 0
    %1256 = vmatpush1.bf16.msra.mxu0 0
    %1257 = vmatprep.subr.bf16.mxu0 0
    %1258 = vmatpush1.bf16.msra.mxu0 0
    %1259 = vmatprep.subr.bf16.mxu0 0
    %1260 = vmatpush1.bf16.msra.mxu0 0
    %1261 = vmatprep.subr.bf16.mxu0 0
    %1262 = vmatpush1.bf16.msra.mxu0 0
    %1263 = vmatprep.subr.bf16.mxu0 0
    %1264 = vmatpush1.bf16.msra.mxu0 0
    %1265 = vmatprep.subr.bf16.mxu0 0
    %1266 = vmatpush1.bf16.msra.mxu0 0
    %1267 = vmatprep.subr.bf16.mxu0 0
    %1268 = vmatpush1.bf16.msra.mxu0 0
    %1269 = vmatprep.subr.bf16.mxu0 0
    %1270 = vmatpush1.bf16.msra.mxu0 0
    %1271 = vmatprep.mubr.bf16.mxu0 0
    %1272 = vmatmul.mubr.bf16.gmra.mrb[0].mxu0 %v1183
    %v1273 = vpop.f32.mrb[0].mxu0
    %v1274 = vadd.f32 0.0, %v1273
    %v1275 = vpop.f32.mrb[0].mxu0
    %v1276 = vadd.f32 0.0, %v1275
    %v1277 = vpop.f32.mrb[0].mxu0
    %v1278 = vadd.f32 0.0, %v1277
    %v1279 = vpop.f32.mrb[0].mxu0
    %v1280 = vadd.f32 0.0, %v1279
    %1281 = vdwg.mxu0
    %1282 = vmatprep.subr.bf16.mxu0 %v1210
    %1283 = vmatpush1.bf16.msra.mxu0 %v1209
    %1284 = vmatprep.subr.bf16.mxu0 %v1214
    %1285 = vmatpush1.bf16.msra.mxu0 %v1213
    %1286 = vmatprep.subr.bf16.mxu0 %v1218
    %1287 = vmatpush1.bf16.msra.mxu0 %v1217
    %1288 = vmatprep.subr.bf16.mxu0 %v1222
    %1289 = vmatpush1.bf16.msra.mxu0 %v1221
    %1290 = vmatprep.subr.bf16.mxu0 %v1226
    %1291 = vmatpush1.bf16.msra.mxu0 %v1225
    %1292 = vmatprep.subr.bf16.mxu0 %v1230
    %1293 = vmatpush1.bf16.msra.mxu0 %v1229
    %1294 = vmatprep.subr.bf16.mxu0 %v1234
    %1295 = vmatpush1.bf16.msra.mxu0 %v1233
    %1296 = vmatprep.subr.bf16.mxu0 %v1238
    %1297 = vmatpush1.bf16.msra.mxu0 %v1237
    %1298 = vmatprep.subr.bf16.mxu0 0
    %1299 = vmatpush1.bf16.msra.mxu0 0
    %1300 = vmatprep.subr.bf16.mxu0 0
    %1301 = vmatpush1.bf16.msra.mxu0 0
    %1302 = vmatprep.subr.bf16.mxu0 0
    %1303 = vmatpush1.bf16.msra.mxu0 0
    %1304 = vmatprep.subr.bf16.mxu0 0
    %1305 = vmatpush1.bf16.msra.mxu0 0
    %1306 = vmatprep.subr.bf16.mxu0 0
    %1307 = vmatpush1.bf16.msra.mxu0 0
    %1308 = vmatprep.subr.bf16.mxu0 0
    %1309 = vmatpush1.bf16.msra.mxu0 0
    %1310 = vmatprep.subr.bf16.mxu0 0
    %1311 = vmatpush1.bf16.msra.mxu0 0
    %1312 = vmatprep.subr.bf16.mxu0 0
    %1313 = vmatpush1.bf16.msra.mxu0 0
    %1314 = vmatprep.mubr.bf16.mxu0 0
    %1315 = vmatmul.mubr.bf16.gmra.mrb[0].mxu0 %v1183
    %v1316 = vpop.f32.mrb[0].mxu0
    %v1317 = vadd.f32 0.0, %v1316
    %v1318 = vpop.f32.mrb[0].mxu0
    %v1319 = vadd.f32 0.0, %v1318
    %v1320 = vpop.f32.mrb[0].mxu0
    %v1321 = vadd.f32 0.0, %v1320
    %v1322 = vpop.f32.mrb[0].mxu0
    %v1323 = vadd.f32 0.0, %v1322
    %1324 = vdwg.mxu0
    %v1325 = vadd.f32 %v1199, %v1274
    %v1326 = vadd.f32 %v1200, %v1276
    %v1327 = vadd.f32 %v1201, %v1317
    %v1328 = vadd.f32 %v1202, %v1319
    %v1329 = vadd.f32 %v1203, %v1278
    %v1330 = vadd.f32 %v1204, %v1280
    %v1331 = vadd.f32 %v1205, %v1321
    %v1332 = vadd.f32 %v1206, %v1323
    %v1333 = vmul.f32 %v1325, 0.5
    %v1334 = vmul.f32 %v1329, 0.5
    %v1335 = vtanh.pop %v1333
    %v1336 = vtanh.pop %v1334
    %v1337 = vmul.f32 %v1335, 0.5
    %v1338 = vmul.f32 %v1336, 0.5
    %v1339 = vadd.f32 %v1337, 0.5
    %v1340 = vadd.f32 %v1338, 0.5
    %v1341 = vmul.f32 %v1326, 0.5
    %v1342 = vmul.f32 %v1330, 0.5
    %v1343 = vtanh.pop %v1341
    %v1344 = vtanh.pop %v1342
    %v1345 = vmul.f32 %v1343, 0.5
    %v1346 = vmul.f32 %v1344, 0.5
    %v1347 = vadd.f32 %v1345, 0.5
    %v1348 = vadd.f32 %v1346, 0.5
    %v1349 = vtanh.pop %v1327
    %v1350 = vtanh.pop %v1331
    %v1351 = vmul.f32 %v1328, 0.5
    %v1352 = vmul.f32 %v1332, 0.5
    %v1353 = vtanh.pop %v1351
    %v1354 = vtanh.pop %v1352
    %v1355 = vmul.f32 %v1353, 0.5
    %v1356 = vmul.f32 %v1354, 0.5
    %v1357 = vadd.f32 %v1355, 0.5
    %v1358 = vadd.f32 %v1356, 0.5
    %v1359 = vmul.f32 %v1347, %v1177
    %v1360 = vmul.f32 %v1348, %v1178
    %v1361 = vmul.f32 %v1339, %v1349
    %v1362 = vmul.f32 %v1340, %v1350
    %v1363 = vadd.f32 %v1359, %v1361
    %v1364 = vadd.f32 %v1360, %v1362
    %v1365 = vtanh.pop %v1363
    %v1366 = vtanh.pop %v1364
    %v1367 = vmul.f32 %v1357, %v1365
    %v1368 = vmul.f32 %v1358, %v1366
    %v1369 = vpack.c.bf16 %v1368, %v1367
    %v1371 = vunpack.c.l.b16 %v1369
    %v1372 = vunpack.c.h.b16 %v1369
    %v1373 = vpack.c.b16 %v1371, %v1371
    %v1374 = vpack.c.b16 %v1372, %v1372
    %s1377 = scalar_lea.vmem [#allocation8], 48
    %1378 = vst [vmem:[%s1377] sm:$0xf] %v1373
    %1379 = vst [vmem:[%s1377 + $0x4] sm:$0xf] %v1374
    %s1380 = scalar_lea.vmem [#allocation5], 224
    %v1381 = vld [vmem:[%s1380] sm:$0xff]
    %v1382 = vld [vmem:[%s1380 + $0x8] sm:$0xff]
    %v1383 = vld [vmem:[%s1380 + $0x10] sm:$0xff]
    %v1384 = vld [vmem:[%s1380 + $0x18] sm:$0xff]
    %v1385 = vunpack.c.l.bf16 %v1381
    %v1386 = vunpack.c.h.bf16 %v1381
    %v1387 = vunpack.c.l.bf16 %v1382
    %v1388 = vunpack.c.h.bf16 %v1382
    %v1389 = vunpack.c.l.bf16 %v1383
    %v1390 = vunpack.c.h.bf16 %v1383
    %v1391 = vunpack.c.l.bf16 %v1384
    %v1392 = vunpack.c.h.bf16 %v1384
    %v1393 = vld [vmem:[#allocation2] sm:$0xff]
    %v1394 = vld [vmem:[#allocation2 + $0x8] sm:$0xff]
    %v1395 = vld [vmem:[#allocation2 + $0x10] sm:$0xff]
    %v1396 = vld [vmem:[#allocation2 + $0x18] sm:$0xff]
    %v1397 = vld [vmem:[#allocation2 + $0x20] sm:$0xff]
    %v1398 = vld [vmem:[#allocation2 + $0x28] sm:$0xff]
    %v1399 = vld [vmem:[#allocation2 + $0x30] sm:$0xff]
    %v1400 = vld [vmem:[#allocation2 + $0x38] sm:$0xff]
    %v1401 = vld [vmem:[#allocation2 + $0x40] sm:$0xff]
    %v1402 = vld [vmem:[#allocation2 + $0x48] sm:$0xff]
    %v1403 = vld [vmem:[#allocation2 + $0x50] sm:$0xff]
    %v1404 = vld [vmem:[#allocation2 + $0x58] sm:$0xff]
    %v1405 = vld [vmem:[#allocation2 + $0x60] sm:$0xff]
    %v1406 = vld [vmem:[#allocation2 + $0x68] sm:$0xff]
    %v1407 = vld [vmem:[#allocation2 + $0x70] sm:$0xff]
    %v1408 = vld [vmem:[#allocation2 + $0x78] sm:$0xff]
    %v1409 = vld [vmem:[#allocation2 + $0x80] sm:$0xff]
    %v1410 = vld [vmem:[#allocation2 + $0x88] sm:$0xff]
    %v1411 = vld [vmem:[#allocation2 + $0x90] sm:$0xff]
    %v1412 = vld [vmem:[#allocation2 + $0x98] sm:$0xff]
    %v1413 = vld [vmem:[#allocation2 + $0xa0] sm:$0xff]
    %v1414 = vld [vmem:[#allocation2 + $0xa8] sm:$0xff]
    %v1415 = vld [vmem:[#allocation2 + $0xb0] sm:$0xff]
    %v1416 = vld [vmem:[#allocation2 + $0xb8] sm:$0xff]
    %v1417 = vld [vmem:[#allocation2 + $0xc0] sm:$0xff]
    %v1418 = vld [vmem:[#allocation2 + $0xc8] sm:$0xff]
    %v1419 = vld [vmem:[#allocation2 + $0xd0] sm:$0xff]
    %v1420 = vld [vmem:[#allocation2 + $0xd8] sm:$0xff]
    %v1421 = vld [vmem:[#allocation2 + $0xe0] sm:$0xff]
    %v1422 = vld [vmem:[#allocation2 + $0xe8] sm:$0xff]
    %v1423 = vld [vmem:[#allocation2 + $0xf0] sm:$0xff]
    %v1424 = vld [vmem:[#allocation2 + $0xf8] sm:$0xff]
    %1425 = vmatprep.subr.bf16.mxu0 %v1394
    %1426 = vmatpush1.bf16.msra.mxu0 %v1393
    %1427 = vmatprep.subr.bf16.mxu0 %v1398
    %1428 = vmatpush1.bf16.msra.mxu0 %v1397
    %1429 = vmatprep.subr.bf16.mxu0 %v1402
    %1430 = vmatpush1.bf16.msra.mxu0 %v1401
    %1431 = vmatprep.subr.bf16.mxu0 %v1406
    %1432 = vmatpush1.bf16.msra.mxu0 %v1405
    %1433 = vmatprep.subr.bf16.mxu0 %v1410
    %1434 = vmatpush1.bf16.msra.mxu0 %v1409
    %1435 = vmatprep.subr.bf16.mxu0 %v1414
    %1436 = vmatpush1.bf16.msra.mxu0 %v1413
    %1437 = vmatprep.subr.bf16.mxu0 %v1418
    %1438 = vmatpush1.bf16.msra.mxu0 %v1417
    %1439 = vmatprep.subr.bf16.mxu0 %v1422
    %1440 = vmatpush1.bf16.msra.mxu0 %v1421
    %1441 = vmatprep.subr.bf16.mxu0 0
    %1442 = vmatpush1.bf16.msra.mxu0 0
    %1443 = vmatprep.subr.bf16.mxu0 0
    %1444 = vmatpush1.bf16.msra.mxu0 0
    %1445 = vmatprep.subr.bf16.mxu0 0
    %1446 = vmatpush1.bf16.msra.mxu0 0
    %1447 = vmatprep.subr.bf16.mxu0 0
    %1448 = vmatpush1.bf16.msra.mxu0 0
    %1449 = vmatprep.subr.bf16.mxu0 0
    %1450 = vmatpush1.bf16.msra.mxu0 0
    %1451 = vmatprep.subr.bf16.mxu0 0
    %1452 = vmatpush1.bf16.msra.mxu0 0
    %1453 = vmatprep.subr.bf16.mxu0 0
    %1454 = vmatpush1.bf16.msra.mxu0 0
    %1455 = vmatprep.subr.bf16.mxu0 0
    %1456 = vmatpush1.bf16.msra.mxu0 0
    %1457 = vmatprep.mubr.bf16.mxu0 0
    %1458 = vmatmul.mubr.bf16.gmra.mrb[0].mxu0 %v1369
    %v1459 = vpop.f32.mrb[0].mxu0
    %v1460 = vadd.f32 0.0, %v1459
    %v1461 = vpop.f32.mrb[0].mxu0
    %v1462 = vadd.f32 0.0, %v1461
    %v1463 = vpop.f32.mrb[0].mxu0
    %v1464 = vadd.f32 0.0, %v1463
    %v1465 = vpop.f32.mrb[0].mxu0
    %v1466 = vadd.f32 0.0, %v1465
    %1467 = vdwg.mxu0
    %1468 = vmatprep.subr.bf16.mxu0 %v1396
    %1469 = vmatpush1.bf16.msra.mxu0 %v1395
    %1470 = vmatprep.subr.bf16.mxu0 %v1400
    %1471 = vmatpush1.bf16.msra.mxu0 %v1399
    %1472 = vmatprep.subr.bf16.mxu0 %v1404
    %1473 = vmatpush1.bf16.msra.mxu0 %v1403
    %1474 = vmatprep.subr.bf16.mxu0 %v1408
    %1475 = vmatpush1.bf16.msra.mxu0 %v1407
    %1476 = vmatprep.subr.bf16.mxu0 %v1412
    %1477 = vmatpush1.bf16.msra.mxu0 %v1411
    %1478 = vmatprep.subr.bf16.mxu0 %v1416
    %1479 = vmatpush1.bf16.msra.mxu0 %v1415
    %1480 = vmatprep.subr.bf16.mxu0 %v1420
    %1481 = vmatpush1.bf16.msra.mxu0 %v1419
    %1482 = vmatprep.subr.bf16.mxu0 %v1424
    %1483 = vmatpush1.bf16.msra.mxu0 %v1423
    %1484 = vmatprep.subr.bf16.mxu0 0
    %1485 = vmatpush1.bf16.msra.mxu0 0
    %1486 = vmatprep.subr.bf16.mxu0 0
    %1487 = vmatpush1.bf16.msra.mxu0 0
    %1488 = vmatprep.subr.bf16.mxu0 0
    %1489 = vmatpush1.bf16.msra.mxu0 0
    %1490 = vmatprep.subr.bf16.mxu0 0
    %1491 = vmatpush1.bf16.msra.mxu0 0
    %1492 = vmatprep.subr.bf16.mxu0 0
    %1493 = vmatpush1.bf16.msra.mxu0 0
    %1494 = vmatprep.subr.bf16.mxu0 0
    %1495 = vmatpush1.bf16.msra.mxu0 0
    %1496 = vmatprep.subr.bf16.mxu0 0
    %1497 = vmatpush1.bf16.msra.mxu0 0
    %1498 = vmatprep.subr.bf16.mxu0 0
    %1499 = vmatpush1.bf16.msra.mxu0 0
    %1500 = vmatprep.mubr.bf16.mxu0 0
    %1501 = vmatmul.mubr.bf16.gmra.mrb[0].mxu0 %v1369
    %v1502 = vpop.f32.mrb[0].mxu0
    %v1503 = vadd.f32 0.0, %v1502
    %v1504 = vpop.f32.mrb[0].mxu0
    %v1505 = vadd.f32 0.0, %v1504
    %v1506 = vpop.f32.mrb[0].mxu0
    %v1507 = vadd.f32 0.0, %v1506
    %v1508 = vpop.f32.mrb[0].mxu0
    %v1509 = vadd.f32 0.0, %v1508
    %1510 = vdwg.mxu0
    %v1511 = vadd.f32 %v1385, %v1460
    %v1512 = vadd.f32 %v1386, %v1462
    %v1513 = vadd.f32 %v1387, %v1503
    %v1514 = vadd.f32 %v1388, %v1505
    %v1515 = vadd.f32 %v1389, %v1464
    %v1516 = vadd.f32 %v1390, %v1466
    %v1517 = vadd.f32 %v1391, %v1507
    %v1518 = vadd.f32 %v1392, %v1509
    %v1519 = vmul.f32 %v1511, 0.5
    %v1520 = vmul.f32 %v1515, 0.5
    %v1521 = vtanh.pop %v1519
    %v1522 = vtanh.pop %v1520
    %v1523 = vmul.f32 %v1521, 0.5
    %v1524 = vmul.f32 %v1522, 0.5
    %v1525 = vadd.f32 %v1523, 0.5
    %v1526 = vadd.f32 %v1524, 0.5
    %v1527 = vmul.f32 %v1512, 0.5
    %v1528 = vmul.f32 %v1516, 0.5
    %v1529 = vtanh.pop %v1527
    %v1530 = vtanh.pop %v1528
    %v1531 = vmul.f32 %v1529, 0.5
    %v1532 = vmul.f32 %v1530, 0.5
    %v1533 = vadd.f32 %v1531, 0.5
    %v1534 = vadd.f32 %v1532, 0.5
    %v1535 = vtanh.pop %v1513
    %v1536 = vtanh.pop %v1517
    %v1537 = vmul.f32 %v1514, 0.5
    %v1538 = vmul.f32 %v1518, 0.5
    %v1539 = vtanh.pop %v1537
    %v1540 = vtanh.pop %v1538
    %v1541 = vmul.f32 %v1539, 0.5
    %v1542 = vmul.f32 %v1540, 0.5
    %v1543 = vadd.f32 %v1541, 0.5
    %v1544 = vadd.f32 %v1542, 0.5
    %v1545 = vmul.f32 %v1533, %v1363
    %v1546 = vmul.f32 %v1534, %v1364
    %v1547 = vmul.f32 %v1525, %v1535
    %v1548 = vmul.f32 %v1526, %v1536
    %v1549 = vadd.f32 %v1545, %v1547
    %v1550 = vadd.f32 %v1546, %v1548
    %v1551 = vtanh.pop %v1549
    %v1552 = vtanh.pop %v1550
    %v1553 = vmul.f32 %v1543, %v1551
    %v1554 = vmul.f32 %v1544, %v1552
    %v1555 = vpack.c.bf16 %v1554, %v1553
    %v1557 = vunpack.c.l.b16 %v1555
    %v1558 = vunpack.c.h.b16 %v1555
    %v1559 = vpack.c.b16 %v1557, %v1557
    %v1560 = vpack.c.b16 %v1558, %v1558
    %s1563 = scalar_lea.vmem [#allocation8], 56
    %1564 = vst [vmem:[%s1563] sm:$0xf] %v1559
    %1565 = vst [vmem:[%s1563 + $0x4] sm:$0xf] %v1560
    %1566 = vst [vmem:[#allocation3] sm:$0xff] %v1553
    %1567 = vst [vmem:[#allocation3 + $0x8] sm:$0xff] %v1554
    %1568 = vst [vmem:[#allocation4] sm:$0xff] %v1549
    %1569 = vst [vmem:[#allocation4 + $0x8] sm:$0xff] %v1550
    // Predicated region
    $region15: #{tpu_custom_call.1} parent=1 // pred_check
      %p1570 = pneg %p28
    $region16: #{tpu_custom_call.1} parent=1 // pred_check_branch
      %1572 = sbr.rel (%p1570) target = $region18
    $region17: #{tpu_custom_call.1} parent=1 // pred_region
      %1573 = vst [vmem:[#allocation9] sm:$0xff] %v1553
      %1574 = vst [vmem:[#allocation9 + $0x8] sm:$0xff] %v1554
    $region18: #{tpu_custom_call.1} parent=1 // pred_fallthru
      _
    // Predicated region
    $region19: #{tpu_custom_call.1} parent=1 // pred_check
      _
    $region20: #{tpu_custom_call.1} parent=1 // pred_check_branch
      %1576 = sbr.rel (0) target = $region22
    $region21: #{tpu_custom_call.1} parent=1 // pred_region
      %s1578 = ssub.s32 1024, 1024
      %1579 = vsyncadd [#allocation7], %s1578
      %s1580 = sshll.u32 [#allocation8], 4
      %s1581 = int_to_ptr.vmem [resolvable:$true] %s1580
      %1586 = dma.vmem_to_hbm [thread:$0]  %s1581, 1024, %s2, [#allocation7], 64, 64, 4
    $region22: #{tpu_custom_call.1} parent=1 // pred_fallthru
      _
    // Predicated region
    $region23: #{tpu_custom_call.1} parent=1 // pred_check
      _
    $region24: #{tpu_custom_call.1} parent=1 // pred_check_branch
      %1588 = sbr.rel (0) target = $region26
    $region25: #{tpu_custom_call.1} parent=1 // pred_region
      %s1590 = ssub.s32 256, 256
      %1591 = vsyncadd [#allocation10], %s1590
      %s1592 = sshll.u32 [#allocation9], 4
      %s1593 = int_to_ptr.vmem [resolvable:$true] %s1592
      %1598 = dma.vmem_to_hbm [thread:$0]  %s1593, 256, %s3, [#allocation10], 128, 128, 8
    $region26: #{tpu_custom_call.1} parent=1 // pred_fallthru
      _
    // Predicated region
    $region27: #{tpu_custom_call.1} parent=1 // pred_check
      _
    $region28: #{tpu_custom_call.1} parent=1 // pred_check_branch
      %1600 = sbr.rel (0) target = $region30
    $region29: #{tpu_custom_call.1} parent=1 // pred_region
      %1601 = dma.done [#allocation7], 1024
    $region30: #{tpu_custom_call.1} parent=1 // pred_fallthru
      _
    // Predicated region
    $region31: #{tpu_custom_call.1} parent=1 // pred_check
      _
    $region32: #{tpu_custom_call.1} parent=1 // pred_check_branch
      %1603 = sbr.rel (0) target = $region34
    $region33: #{tpu_custom_call.1} parent=1 // pred_region
      %1604 = dma.done [#allocation10], 256
    $region34: #{tpu_custom_call.1} parent=1 // pred_fallthru
      _
    %1605 = vsyncpa [#allocation6], 1
    %1606 = vsyncpa [#allocation7], 1
    %1607 = vsyncpa [#allocation10], 1

</llo_original>
